<compile_context>
chip_gen: v6e
topology: v6e:2x2x1
jax: 0.10.0
libtpu: 0.0.40
codegen_flags: <defaults>
</compile_context>

<pallas_src>
import jax
import jax.numpy as jnp
from jax.experimental import pallas as pl
from jax.experimental.pallas import tpu as pltpu

EPS = 1e-5
LANES = 128


def _round_up(x, m):
    return (x + m - 1) // m * m


# ----------------------------- maxpool 2x2 ---------------------------------

def _maxpool_kernel(x_ref, o_ref):
    # x_ref block: (1, th, 2, Wo, 2C)   o_ref block: (1, th, Wo, C)
    x = x_ref[...]
    m = jnp.maximum(x[0, :, 0], x[0, :, 1])        # row-pair max  (th, Wo, 2C)
    c = o_ref.shape[-1]
    # adjacent-column pair: even/odd pixels live in lane halves [:C] / [C:]
    o_ref[0] = jnp.maximum(m[..., :c], m[..., c:])


def maxpool2x2(x_nhwc):
    n, h, w, c = x_nhwc.shape
    ho, wo = h // 2, w // 2
    # Free contiguous reshape: the 2x2 window of output pixel (i, j) becomes
    # rows {0,1} of dim 2 and lane halves [:C]/[C:] of column j.
    xr = x_nhwc.reshape(n, ho, 2, wo, 2 * c)
    th = min(ho, 128)
    while ho % th:
        th //= 2
    grid = (n, ho // th)
    return pl.pallas_call(
        _maxpool_kernel,
        grid=grid,
        in_specs=[pl.BlockSpec((1, th, 2, wo, 2 * c),
                               lambda i, j: (i, j, 0, 0, 0))],
        out_specs=pl.BlockSpec((1, th, wo, c), lambda i, j: (i, j, 0, 0)),
        out_shape=jax.ShapeDtypeStruct((n, ho, wo, c), x_nhwc.dtype),
        compiler_params=pltpu.CompilerParams(
            dimension_semantics=("parallel", "parallel")),
    )(xr)


# ------------------- conv3x3 matmul + BatchNorm statistics ------------------

def _conv_stats_kernel(p_ref, w_ref, y_ref, s_ref, ss_ref):
    # p_ref: (bm, K) bf16 patch tile    w_ref: (K, Cp) bf16 (VMEM-resident)
    # y_ref: (bm, Cp) f32               s_ref/ss_ref: (1, 1, Cp) f32 partials
    y = jnp.dot(p_ref[...], w_ref[...], preferred_element_type=jnp.float32)
    y_ref[...] = y
    s_ref[0] = jnp.sum(y, axis=0, keepdims=True)
    ss_ref[0] = jnp.sum(y * y, axis=0, keepdims=True)


def conv3x3_matmul_stats(patches_bf16, w_mat_bf16, block_m=512):
    m, k = patches_bf16.shape
    cp = w_mat_bf16.shape[1]
    bm = min(block_m, m)
    if bm == m and m >= 16 and (m // 2) % 8 == 0:
        bm = m // 2                      # keep >= 2 grid steps (pipelining)
    while m % bm:
        bm //= 2
    nt = m // bm
    y, s_p, ss_p = pl.pallas_call(
        _conv_stats_kernel,
        grid=(nt,),
        in_specs=[pl.BlockSpec((bm, k), lambda i: (i, 0)),
                  pl.BlockSpec((k, cp), lambda i: (0, 0))],     # resident W
        out_specs=(pl.BlockSpec((bm, cp), lambda i: (i, 0)),
                   pl.BlockSpec((1, 1, cp), lambda i: (i, 0, 0)),
                   pl.BlockSpec((1, 1, cp), lambda i: (i, 0, 0))),
        out_shape=(jax.ShapeDtypeStruct((m, cp), jnp.float32),
                   jax.ShapeDtypeStruct((nt, 1, cp), jnp.float32),
                   jax.ShapeDtypeStruct((nt, 1, cp), jnp.float32)),
        compiler_params=pltpu.CompilerParams(
            dimension_semantics=("parallel",)),
    )(patches_bf16, w_mat_bf16)
    # tiny cross-tile reduction of the per-tile partials
    return y, jnp.sum(s_p[:, 0, :], axis=0), jnp.sum(ss_p[:, 0, :], axis=0)


# ----------------------- fused BatchNorm + ReLU kernel ----------------------

def _bn_relu_kernel(y_ref, sc_ref, sh_ref, o_ref):
    # all elementwise work in f32 (no bf16 VPU path on v5e)
    o_ref[...] = jnp.maximum(y_ref[...] * sc_ref[...] + sh_ref[...], 0.0)


def bn_relu(y, scale, shift, block_m=512):
    m, cp = y.shape
    bm = min(block_m, m)
    while m % bm:
        bm //= 2
    nt = m // bm
    return pl.pallas_call(
        _bn_relu_kernel,
        grid=(nt,),
        in_specs=[pl.BlockSpec((bm, cp), lambda i: (i, 0)),
                  pl.BlockSpec((1, cp), lambda i: (0, 0)),
                  pl.BlockSpec((1, cp), lambda i: (0, 0))],
        out_specs=pl.BlockSpec((bm, cp), lambda i: (i, 0)),
        out_shape=jax.ShapeDtypeStruct((m, cp), jnp.float32),
        compiler_params=pltpu.CompilerParams(
            dimension_semantics=("parallel",)),
    )(y, scale.reshape(1, cp), shift.reshape(1, cp))


# ------------------------------- JAX glue -----------------------------------

def _im2col_3x3(a_nhwc):
    """3x3 (pad=1) patch matrix (N*H*W, 9*C), cast to bf16 for the MXU."""
    n, h, w, c = a_nhwc.shape
    ap = jnp.pad(a_nhwc, ((0, 0), (1, 1), (1, 1), (0, 0)))
    taps = [ap[:, dy:dy + h, dx:dx + w, :] for dy in range(3) for dx in range(3)]
    patches = jnp.stack(taps, axis=3).reshape(n * h * w, 9 * c)
    return patches.astype(jnp.bfloat16)


def _pack_weight(w_oihw, cin_pad, cout_pad):
    """OIHW conv weight -> (9*cin_pad, cout_pad) bf16 matmul operand."""
    co, ci, kh, kw = w_oihw.shape
    wp = jnp.pad(w_oihw, ((0, cout_pad - co), (0, cin_pad - ci), (0, 0), (0, 0)))
    wm = jnp.transpose(wp, (2, 3, 1, 0)).reshape(kh * kw * cin_pad, cout_pad)
    return wm.astype(jnp.bfloat16)


def _bn_affine(s, ss, gamma, beta, count, cp):
    """Training-mode BatchNorm folded into per-channel scale/shift (f32)."""
    g = jnp.pad(gamma, (0, cp - gamma.shape[0]))   # padded channels: gamma = 0
    b = jnp.pad(beta, (0, cp - beta.shape[0]))     #                  beta  = 0
    mean = s / count
    var = jnp.maximum(ss / count - mean * mean, 0.0)   # biased var, as BN fwd
    scale = g * jax.lax.rsqrt(var + EPS)
    shift = b - mean * scale
    return scale, shift


@jax.jit
def down_forward(x_nchw, w1, g1, b1, w2, g2, b2):
    co1, co2 = w1.shape[0], w2.shape[0]
    cp1 = _round_up(co1, LANES)        # lane-dense conv outputs (pad Cout)
    cp2 = _round_up(co2, LANES)

    x = jnp.transpose(x_nchw, (0, 2, 3, 1))            # NCHW -> NHWC
    x = maxpool2x2(x)                                  # (N, H/2, W/2, Cin)
    n, h, w, cin = x.shape
    m = n * h * w

    # conv1 + batch stats.  BN1 + ReLU1 is applied below, fused by XLA into
    # the pad + im2col gather that feeds conv2 (no standalone HBM round trip).
    y1, s1, ss1 = conv3x3_matmul_stats(_im2col_3x3(x),
                                       _pack_weight(w1, cin, cp1))
    sc1, sh1 = _bn_affine(s1, ss1, g1, b1, jnp.float32(m), cp1)

    a1 = jnp.maximum(y1 * sc1[None, :] + sh1[None, :], 0.0)
    p2 = _im2col_3x3(a1.reshape(n, h, w, cp1))

    # conv2 + batch stats, then BN2 + ReLU2 as a lane-dense Pallas kernel.
    y2, s2, ss2 = conv3x3_matmul_stats(p2, _pack_weight(w2, cp1, cp2))
    sc2, sh2 = _bn_affine(s2, ss2, g2, b2, jnp.float32(m), cp2)
    a2 = bn_relu(y2, sc2, sh2)

    out = a2[:, :co2].reshape(n, h, w, co2)
    return jnp.transpose(out, (0, 3, 1, 2))            # NHWC -> NCHW


# ------------------------- pure-JAX reference check -------------------------

def _ref_conv(x_nhwc, w_oihw):
    w_hwio = jnp.transpose(w_oihw, (2, 3, 1, 0))
    return jax.lax.conv_general_dilated(
        x_nhwc, w_hwio, (1, 1), "SAME",
        dimension_numbers=("NHWC", "HWIO", "NHWC"))


def _ref_bn_relu(y, gamma, beta):
    mean = jnp.mean(y, axis=(0, 1, 2))
    var = jnp.var(y, axis=(0, 1, 2))
    return jnp.maximum((y - mean) / jnp.sqrt(var + EPS) * gamma + beta, 0.0)


def down_ref(x_nchw, w1, g1, b1, w2, g2, b2):
    x = jnp.transpose(x_nchw, (0, 2, 3, 1))
    x = jax.lax.reduce_window(x, -jnp.inf, jax.lax.max,
                              (1, 2, 2, 1), (1, 2, 2, 1), "VALID")
    x = _ref_bn_relu(_ref_conv(x, w1), g1, b1)
    x = _ref_bn_relu(_ref_conv(x, w2), g2, b2)
    return jnp.transpose(x, (0, 3, 1, 2))


# ---------------------------------- main -------------------------------------

if __name__ == "__main__":
    in_channels, out_channels = 4, 8
    N, H, W = 2, 16, 16

    key = jax.random.PRNGKey(0)
    kx, kw1, kw2 = jax.random.split(key, 3)

    x = jax.random.normal(kx, (N, in_channels, H, W), dtype=jnp.float32)

    # Conv2d weights (OIHW, bias=False); BN gamma=1, beta=0 as in nn.BatchNorm2d.
    w1 = 0.1 * jax.random.normal(kw1, (out_channels, in_channels, 3, 3), jnp.float32)
    g1 = jnp.ones((out_channels,), jnp.float32)
    b1 = jnp.zeros((out_channels,), jnp.float32)
    w2 = 0.1 * jax.random.normal(kw2, (out_channels, out_channels, 3, 3), jnp.float32)
    g2 = jnp.ones((out_channels,), jnp.float32)
    b2 = jnp.zeros((out_channels,), jnp.float32)

    out = down_forward(x, w1, g1, b1, w2, g2, b2)
    out = jax.block_until_ready(out)

    ref = down_ref(x, w1, g1, b1, w2, g2, b2)
    assert out.shape == (N, out_channels, H // 2, W // 2), out.shape
    # Tolerance loosened vs. a pure-f32 path: the two conv matmuls run with
    # bf16 operands (f32 accumulation), as requested by the perf review.
    err = float(jnp.max(jnp.abs(out - ref)))
    assert jnp.allclose(out, ref, rtol=5e-2, atol=5e-2), err

    print("KERNEL_OK")
</pallas_src>

<mosaic_0001>
module attributes {stable_mosaic.version = 11 : i64} {
  func.func @_maxpool_kernel(%arg0: i32, %arg1: i32, %arg2: memref<1x8x2x8x8xf32, #tpu.memory_space<vmem>>, %arg3: memref<1x8x8x4xf32, #tpu.memory_space<vmem>>) attributes {dimension_semantics = [#tpu.dimension_semantics<parallel>, #tpu.dimension_semantics<parallel>], iteration_bounds = array<i64: 2, 1>, scalar_prefetch = 0 : i64, scratch_operands = 0 : i64, tpu.core_type = #tpu.core_type<tc>, window_params = [{transform_indices = @transform_0, window_bounds = array<i64: 1, 8, 2, 8, 8>}, {transform_indices = @transform_1, window_bounds = array<i64: 1, 8, 8, 4>}]} {
    %c0 = arith.constant 0 : index
    %c0_0 = arith.constant 0 : index
    %c0_1 = arith.constant 0 : index
    %c0_2 = arith.constant 0 : index
    %c0_3 = arith.constant 0 : index
    %0 = vector.load %arg2[%c0, %c0_0, %c0_1, %c0_2, %c0_3] : memref<1x8x2x8x8xf32, #tpu.memory_space<vmem>>, vector<1x8x2x8x8xf32>
    %1 = vector.extract_strided_slice %0 {offsets = [0, 0, 0, 0, 0], sizes = [1, 8, 1, 8, 8], strides = [1, 1, 1, 1, 1]} : vector<1x8x2x8x8xf32> to vector<1x8x1x8x8xf32>
    %2 = vector.shape_cast %1 : vector<1x8x1x8x8xf32> to vector<8x8x8xf32>
    %3 = vector.extract_strided_slice %0 {offsets = [0, 0, 1, 0, 0], sizes = [1, 8, 1, 8, 8], strides = [1, 1, 1, 1, 1]} : vector<1x8x2x8x8xf32> to vector<1x8x1x8x8xf32>
    %4 = vector.shape_cast %3 : vector<1x8x1x8x8xf32> to vector<8x8x8xf32>
    %5 = arith.maximumf %2, %4 : vector<8x8x8xf32>
    %6 = vector.extract_strided_slice %5 {offsets = [0, 0, 0], sizes = [8, 8, 4], strides = [1, 1, 1]} : vector<8x8x8xf32> to vector<8x8x4xf32>
    %7 = vector.extract_strided_slice %5 {offsets = [0, 0, 4], sizes = [8, 8, 4], strides = [1, 1, 1]} : vector<8x8x8xf32> to vector<8x8x4xf32>
    %8 = arith.maximumf %6, %7 : vector<8x8x4xf32>
    %c0_4 = arith.constant 0 : index
    %c0_5 = arith.constant 0 : index
    %c0_6 = arith.constant 0 : index
    %c0_7 = arith.constant 0 : index
    %9 = vector.load %arg3[%c0_4, %c0_5, %c0_6, %c0_7] : memref<1x8x8x4xf32, #tpu.memory_space<vmem>>, vector<1x8x8x4xf32>
    %10 = vector.shape_cast %9 : vector<1x8x8x4xf32> to vector<8x8x4xf32>
    %11 = vector.shape_cast %8 : vector<8x8x4xf32> to vector<1x8x8x4xf32>
    tpu.vector_store %arg3[%c0_4, %c0_5, %c0_6, %c0_7], %11 {strides = array<i32>} : memref<1x8x8x4xf32, #tpu.memory_space<vmem>>, vector<1x8x8x4xf32>,
    return
  }
  func.func @transform_0(%arg0: i32, %arg1: i32) -> (i32, i32, i32, i32, i32) {
    %c0_i32 = arith.constant 0 : i32
    %c0_i32_0 = arith.constant 0 : i32
    %c0_i32_1 = arith.constant 0 : i32
    %c0_i32_2 = arith.constant 0 : i32
    return %arg0, %arg1, %c0_i32, %c0_i32_0, %c0_i32_1 : i32, i32, i32, i32, i32
  }
  func.func @transform_1(%arg0: i32, %arg1: i32) -> (i32, i32, i32, i32) {
    %c0_i32 = arith.constant 0 : i32
    %c0_i32_0 = arith.constant 0 : i32
    %c0_i32_1 = arith.constant 0 : i32
    return %arg0, %arg1, %c0_i32, %c0_i32_0 : i32, i32, i32, i32
  }
}

module attributes {stable_mosaic.version = 11 : i64} {
  func.func @_conv_stats_kernel(%arg0: i32, %arg1: memref<64x36xbf16, #tpu.memory_space<vmem>>, %arg2: memref<36x128xbf16, #tpu.memory_space<vmem>>, %arg3: memref<64x128xf32, #tpu.memory_space<vmem>>, %arg4: memref<1x1x128xf32, #tpu.memory_space<vmem>>, %arg5: memref<1x1x128xf32, #tpu.memory_space<vmem>>) attributes {dimension_semantics = [#tpu.dimension_semantics<parallel>], iteration_bounds = array<i64: 2>, scalar_prefetch = 0 : i64, scratch_operands = 0 : i64, tpu.core_type = #tpu.core_type<tc>, window_params = [{transform_indices = @transform_0, window_bounds = array<i64: 64, 36>}, {pipeline_mode = #tpu.pipeline_mode<synchronous>, transform_indices = @transform_1, window_bounds = array<i64: 36, 128>}, {transform_indices = @transform_2, window_bounds = array<i64: 64, 128>}, {transform_indices = @transform_3, window_bounds = array<i64: 1, 1, 128>}, {transform_indices = @transform_4, window_bounds = array<i64: 1, 1, 128>}]} {
    %c0 = arith.constant 0 : index
    %c0_0 = arith.constant 0 : index
    %0 = vector.load %arg1[%c0, %c0_0] : memref<64x36xbf16, #tpu.memory_space<vmem>>, vector<64x36xbf16>
    %c0_1 = arith.constant 0 : index
    %c0_2 = arith.constant 0 : index
    %1 = vector.load %arg2[%c0_1, %c0_2] : memref<36x128xbf16, #tpu.memory_space<vmem>>, vector<36x128xbf16>
    %cst = arith.constant dense<0.000000e+00> : vector<64x128xf32>
    %2 = tpu.matmul %0, %1, %cst {dimension_numbers = #tpu.dot_dimension_numbers<[1], [0], [0], [1], [0, 0, 1, 1], [], []>} : vector<64x36xbf16>, vector<36x128xbf16>, vector<64x128xf32> -> vector<64x128xf32>
    %c0_3 = arith.constant 0 : index
    %c0_4 = arith.constant 0 : index
    %3 = vector.load %arg3[%c0_3, %c0_4] : memref<64x128xf32, #tpu.memory_space<vmem>>, vector<64x128xf32>
    tpu.vector_store %arg3[%c0_3, %c0_4], %2 {strides = array<i32>} : memref<64x128xf32, #tpu.memory_space<vmem>>, vector<64x128xf32>,
    %cst_5 = arith.constant dense<0.000000e+00> : vector<128xf32>
    %4 = vector.multi_reduction <add>, %2, %cst_5 [0] : vector<64x128xf32> to vector<128xf32>
    %5 = vector.shape_cast %4 : vector<128xf32> to vector<1x128xf32>
    %c0_6 = arith.constant 0 : index
    %c0_7 = arith.constant 0 : index
    %c0_8 = arith.constant 0 : index
    %6 = vector.load %arg4[%c0_6, %c0_7, %c0_8] : memref<1x1x128xf32, #tpu.memory_space<vmem>>, vector<1x1x128xf32>
    %7 = vector.shape_cast %6 : vector<1x1x128xf32> to vector<1x128xf32>
    %8 = vector.shape_cast %5 : vector<1x128xf32> to vector<1x1x128xf32>
    tpu.vector_store %arg4[%c0_6, %c0_7, %c0_8], %8 {strides = array<i32>} : memref<1x1x128xf32, #tpu.memory_space<vmem>>, vector<1x1x128xf32>,
    %9 = arith.mulf %2, %2 : vector<64x128xf32>
    %cst_9 = arith.constant dense<0.000000e+00> : vector<128xf32>
    %10 = vector.multi_reduction <add>, %9, %cst_9 [0] : vector<64x128xf32> to vector<128xf32>
    %11 = vector.shape_cast %10 : vector<128xf32> to vector<1x128xf32>
    %c0_10 = arith.constant 0 : index
    %c0_11 = arith.constant 0 : index
    %c0_12 = arith.constant 0 : index
    %12 = vector.load %arg5[%c0_10, %c0_11, %c0_12] : memref<1x1x128xf32, #tpu.memory_space<vmem>>, vector<1x1x128xf32>
    %13 = vector.shape_cast %12 : vector<1x1x128xf32> to vector<1x128xf32>
    %14 = vector.shape_cast %11 : vector<1x128xf32> to vector<1x1x128xf32>
    tpu.vector_store %arg5[%c0_10, %c0_11, %c0_12], %14 {strides = array<i32>} : memref<1x1x128xf32, #tpu.memory_space<vmem>>, vector<1x1x128xf32>,
    return
  }
  func.func @transform_0(%arg0: i32) -> (i32, i32) {
    %c0_i32 = arith.constant 0 : i32
    %c0_i32_0 = arith.constant 0 : i32
    return %arg0, %c0_i32 : i32, i32
  }
  func.func @transform_1(%arg0: i32) -> (i32, i32) {
    %c0_i32 = arith.constant 0 : i32
    %c0_i32_0 = arith.constant 0 : i32
    %c0_i32_1 = arith.constant 0 : i32
    return %c0_i32, %c0_i32_0 : i32, i32
  }
  func.func @transform_2(%arg0: i32) -> (i32, i32) {
    %c0_i32 = arith.constant 0 : i32
    %c0_i32_0 = arith.constant 0 : i32
    return %arg0, %c0_i32 : i32, i32
  }
  func.func @transform_3(%arg0: i32) -> (i32, i32, i32) {
    %c0_i32 = arith.constant 0 : i32
    %c0_i32_0 = arith.constant 0 : i32
    %c0_i32_1 = arith.constant 0 : i32
    return %arg0, %c0_i32, %c0_i32_0 : i32, i32, i32
  }
  func.func @transform_4(%arg0: i32) -> (i32, i32, i32) {
    %c0_i32 = arith.constant 0 : i32
    %c0_i32_0 = arith.constant 0 : i32
    %c0_i32_1 = arith.constant 0 : i32
    return %arg0, %c0_i32, %c0_i32_0 : i32, i32, i32
  }
}

module attributes {stable_mosaic.version = 11 : i64} {
  func.func @_conv_stats_kernel(%arg0: i32, %arg1: memref<64x1152xbf16, #tpu.memory_space<vmem>>, %arg2: memref<1152x128xbf16, #tpu.memory_space<vmem>>, %arg3: memref<64x128xf32, #tpu.memory_space<vmem>>, %arg4: memref<1x1x128xf32, #tpu.memory_space<vmem>>, %arg5: memref<1x1x128xf32, #tpu.memory_space<vmem>>) attributes {dimension_semantics = [#tpu.dimension_semantics<parallel>], iteration_bounds = array<i64: 2>, scalar_prefetch = 0 : i64, scratch_operands = 0 : i64, tpu.core_type = #tpu.core_type<tc>, window_params = [{transform_indices = @transform_0, window_bounds = array<i64: 64, 1152>}, {pipeline_mode = #tpu.pipeline_mode<synchronous>, transform_indices = @transform_1, window_bounds = array<i64: 1152, 128>}, {transform_indices = @transform_2, window_bounds = array<i64: 64, 128>}, {transform_indices = @transform_3, window_bounds = array<i64: 1, 1, 128>}, {transform_indices = @transform_4, window_bounds = array<i64: 1, 1, 128>}]} {
    %c0 = arith.constant 0 : index
    %c0_0 = arith.constant 0 : index
    %0 = vector.load %arg1[%c0, %c0_0] : memref<64x1152xbf16, #tpu.memory_space<vmem>>, vector<64x1152xbf16>
    %c0_1 = arith.constant 0 : index
    %c0_2 = arith.constant 0 : index
    %1 = vector.load %arg2[%c0_1, %c0_2] : memref<1152x128xbf16, #tpu.memory_space<vmem>>, vector<1152x128xbf16>
    %cst = arith.constant dense<0.000000e+00> : vector<64x128xf32>
    %2 = tpu.matmul %0, %1, %cst {dimension_numbers = #tpu.dot_dimension_numbers<[1], [0], [0], [1], [0, 0, 1, 1], [], []>} : vector<64x1152xbf16>, vector<1152x128xbf16>, vector<64x128xf32> -> vector<64x128xf32>
    %c0_3 = arith.constant 0 : index
    %c0_4 = arith.constant 0 : index
    %3 = vector.load %arg3[%c0_3, %c0_4] : memref<64x128xf32, #tpu.memory_space<vmem>>, vector<64x128xf32>
    tpu.vector_store %arg3[%c0_3, %c0_4], %2 {strides = array<i32>} : memref<64x128xf32, #tpu.memory_space<vmem>>, vector<64x128xf32>,
    %cst_5 = arith.constant dense<0.000000e+00> : vector<128xf32>
    %4 = vector.multi_reduction <add>, %2, %cst_5 [0] : vector<64x128xf32> to vector<128xf32>
    %5 = vector.shape_cast %4 : vector<128xf32> to vector<1x128xf32>
    %c0_6 = arith.constant 0 : index
    %c0_7 = arith.constant 0 : index
    %c0_8 = arith.constant 0 : index
    %6 = vector.load %arg4[%c0_6, %c0_7, %c0_8] : memref<1x1x128xf32, #tpu.memory_space<vmem>>, vector<1x1x128xf32>
    %7 = vector.shape_cast %6 : vector<1x1x128xf32> to vector<1x128xf32>
    %8 = vector.shape_cast %5 : vector<1x128xf32> to vector<1x1x128xf32>
    tpu.vector_store %arg4[%c0_6, %c0_7, %c0_8], %8 {strides = array<i32>} : memref<1x1x128xf32, #tpu.memory_space<vmem>>, vector<1x1x128xf32>,
    %9 = arith.mulf %2, %2 : vector<64x128xf32>
    %cst_9 = arith.constant dense<0.000000e+00> : vector<128xf32>
    %10 = vector.multi_reduction <add>, %9, %cst_9 [0] : vector<64x128xf32> to vector<128xf32>
    %11 = vector.shape_cast %10 : vector<128xf32> to vector<1x128xf32>
    %c0_10 = arith.constant 0 : index
    %c0_11 = arith.constant 0 : index
    %c0_12 = arith.constant 0 : index
    %12 = vector.load %arg5[%c0_10, %c0_11, %c0_12] : memref<1x1x128xf32, #tpu.memory_space<vmem>>, vector<1x1x128xf32>
    %13 = vector.shape_cast %12 : vector<1x1x128xf32> to vector<1x128xf32>
    %14 = vector.shape_cast %11 : vector<1x128xf32> to vector<1x1x128xf32>
    tpu.vector_store %arg5[%c0_10, %c0_11, %c0_12], %14 {strides = array<i32>} : memref<1x1x128xf32, #tpu.memory_space<vmem>>, vector<1x1x128xf32>,
    return
  }
  func.func @transform_0(%arg0: i32) -> (i32, i32) {
    %c0_i32 = arith.constant 0 : i32
    %c0_i32_0 = arith.constant 0 : i32
    return %arg0, %c0_i32 : i32, i32
  }
  func.func @transform_1(%arg0: i32) -> (i32, i32) {
    %c0_i32 = arith.constant 0 : i32
    %c0_i32_0 = arith.constant 0 : i32
    %c0_i32_1 = arith.constant 0 : i32
    return %c0_i32, %c0_i32_0 : i32, i32
  }
  func.func @transform_2(%arg0: i32) -> (i32, i32) {
    %c0_i32 = arith.constant 0 : i32
    %c0_i32_0 = arith.constant 0 : i32
    return %arg0, %c0_i32 : i32, i32
  }
  func.func @transform_3(%arg0: i32) -> (i32, i32, i32) {
    %c0_i32 = arith.constant 0 : i32
    %c0_i32_0 = arith.constant 0 : i32
    %c0_i32_1 = arith.constant 0 : i32
    return %arg0, %c0_i32, %c0_i32_0 : i32, i32, i32
  }
  func.func @transform_4(%arg0: i32) -> (i32, i32, i32) {
    %c0_i32 = arith.constant 0 : i32
    %c0_i32_0 = arith.constant 0 : i32
    %c0_i32_1 = arith.constant 0 : i32
    return %arg0, %c0_i32, %c0_i32_0 : i32, i32, i32
  }
}

module attributes {stable_mosaic.version = 11 : i64} {
  func.func @_bn_relu_kernel(%arg0: i32, %arg1: memref<128x128xf32, #tpu.memory_space<vmem>>, %arg2: memref<1x128xf32, #tpu.memory_space<vmem>>, %arg3: memref<1x128xf32, #tpu.memory_space<vmem>>, %arg4: memref<128x128xf32, #tpu.memory_space<vmem>>) attributes {dimension_semantics = [#tpu.dimension_semantics<parallel>], iteration_bounds = array<i64: 1>, scalar_prefetch = 0 : i64, scratch_operands = 0 : i64, tpu.core_type = #tpu.core_type<tc>, window_params = [{transform_indices = @transform_0, window_bounds = array<i64: 128, 128>}, {pipeline_mode = #tpu.pipeline_mode<synchronous>, transform_indices = @transform_1, window_bounds = array<i64: 1, 128>}, {pipeline_mode = #tpu.pipeline_mode<synchronous>, transform_indices = @transform_2, window_bounds = array<i64: 1, 128>}, {transform_indices = @transform_3, window_bounds = array<i64: 128, 128>}]} {
    %c0 = arith.constant 0 : index
    %c0_0 = arith.constant 0 : index
    %0 = vector.load %arg1[%c0, %c0_0] : memref<128x128xf32, #tpu.memory_space<vmem>>, vector<128x128xf32>
    %c0_1 = arith.constant 0 : index
    %c0_2 = arith.constant 0 : index
    %1 = vector.load %arg2[%c0_1, %c0_2] : memref<1x128xf32, #tpu.memory_space<vmem>>, vector<1x128xf32>
    %2 = vector.broadcast %1 : vector<1x128xf32> to vector<128x128xf32>
    %3 = arith.mulf %0, %2 : vector<128x128xf32>
    %c0_3 = arith.constant 0 : index
    %c0_4 = arith.constant 0 : index
    %4 = vector.load %arg3[%c0_3, %c0_4] : memref<1x128xf32, #tpu.memory_space<vmem>>, vector<1x128xf32>
    %5 = vector.broadcast %4 : vector<1x128xf32> to vector<128x128xf32>
    %6 = arith.addf %3, %5 : vector<128x128xf32>
    %cst = arith.constant 0.000000e+00 : f32
    %7 = vector.broadcast %cst : f32 to vector<128x128xf32>
    %8 = arith.maximumf %6, %7 : vector<128x128xf32>
    %c0_5 = arith.constant 0 : index
    %c0_6 = arith.constant 0 : index
    %9 = vector.load %arg4[%c0_5, %c0_6] : memref<128x128xf32, #tpu.memory_space<vmem>>, vector<128x128xf32>
    tpu.vector_store %arg4[%c0_5, %c0_6], %8 {strides = array<i32>} : memref<128x128xf32, #tpu.memory_space<vmem>>, vector<128x128xf32>,
    return
  }
  func.func @transform_0(%arg0: i32) -> (i32, i32) {
    %c0_i32 = arith.constant 0 : i32
    %c0_i32_0 = arith.constant 0 : i32
    return %arg0, %c0_i32 : i32, i32
  }
  func.func @transform_1(%arg0: i32) -> (i32, i32) {
    %c0_i32 = arith.constant 0 : i32
    %c0_i32_0 = arith.constant 0 : i32
    %c0_i32_1 = arith.constant 0 : i32
    return %c0_i32, %c0_i32_0 : i32, i32
  }
  func.func @transform_2(%arg0: i32) -> (i32, i32) {
    %c0_i32 = arith.constant 0 : i32
    %c0_i32_0 = arith.constant 0 : i32
    %c0_i32_1 = arith.constant 0 : i32
    return %c0_i32, %c0_i32_0 : i32, i32
  }
  func.func @transform_3(%arg0: i32) -> (i32, i32) {
    %c0_i32 = arith.constant 0 : i32
    %c0_i32_0 = arith.constant 0 : i32
    return %arg0, %c0_i32 : i32, i32
  }
}

</mosaic_0001>

<llo_original>
// kernel: down_forward.4
$region0: #{down_forward.4}
  #allocation0 [shape = 'u32[]', space=smem, size = 0x4, offset = 0x4, fixed_abs, tag = 'smem constant byte address 0x4 - core index']
  #allocation1 [shape = 'u32[144,128]{1,0:T(1,128)}', space=vmem, size = 0x12000, scoped, tag = 'internal scratch']
  %s0 = inlined_call_operand.vmem [shape: f32[2,8,2,8,8], index: 0, kind: input, shape index: {}]
  %s1 = inlined_call_operand.vmem [shape: f32[2,8,8,4], index: 1, kind: output, shape index: {}]
  %s2 = sld [smem:[#allocation0]]
  $region37: #{down_forward.4} parent=0
    _
  %s4 = ssub.s32 1, %s2
  %s5 = scalar_select 0, %s4, %s2
  loop: start=0, step=1, limit=4
  $region2: #{down_forward.4} parent=0 // loop_pre_header
    _
  $region3: #{down_forward.4} parent=0 // loop_header
    %s7 = sphi 0, %s11
    %p8 = scmp.ge.s32.totalorder %s7, 4
    %s14 = sphi 0, %s26
    %s15 = sphi 0, %s22
    %s16 = sphi 0, %s14
    %s17 = sphi 0, %s15
    %s18 = sphi 0, %s16
    %s19 = sphi 0, %s17
    %s31 = sphi 0, %s33
    %s34 = sphi 0, %s31
    %s35 = sphi 0, %s34
    %s51 = sphi 0, %s35
    %s59 = sphi 0, %s61
    %s62 = sphi 0, %s59
    %s63 = sphi 0, %s62
    %s79 = sphi 0, %s63
  $region4: #{down_forward.4} parent=0 // loop_header_branch
    %10 = sbr.rel (%p8) target = $region8
  $region5: #{down_forward.4} parent=0 // loop_body
    %s12 = ssub.s32 %s7, 1
    %s13 = ssub.s32 %s7, 2
    %s20 = sadd.s32 1, %s15
    %p21 = scmp.ge.s32.totalorder %s20, 1
    %s22 = scalar_select %p21, 0, %s20
    %s23 = sadd.s32 1, %s14
    %s24 = scalar_select %p21, %s23, %s14
    %p25 = scmp.ge.s32.totalorder %s24, 2
    %s26 = scalar_select %p25, 0, %s24
    %s27 = ssub.s32 %s14, %s26
    %s28 = ssub.s32 %s15, %s22
    %s29 = sor.u32 %s27, %s28
    %p30 = scmp.eq.s32.totalorder %s29, 0
    %s32 = sadd.s32 %s31, 1
    %s33 = scalar_select %p30, %s31, %s32
    %p36 = pneg %p30
    %p37 = scmp.eq.s32.totalorder %s7, 1
    %p38 = por %p36, %p37
    %p39 = scmp.ne.s32.totalorder %s31, %s34
    %p40 = scmp.eq.s32.totalorder %s7, 0
    %p41 = por %p39, %p40
    %p42 = scmp.ne.s32.totalorder %s31, %s34
    %p43 = scmp.eq.s32.totalorder %s12, 1
    %p44 = por %p42, %p43
    %p45 = scmp.ne.s32.totalorder %s34, %s35
    %p46 = scmp.eq.s32.totalorder %s12, 0
    %p47 = por %p45, %p46
    %p48 = scmp.ne.s32.totalorder %s34, %s35
    %p49 = scmp.eq.s32.totalorder %s13, 1
    %p50 = por %p48, %p49
    %p52 = scmp.ne.s32.totalorder %s35, %s51
    %p53 = scmp.eq.s32.totalorder %s13, 0
    %p54 = por %p52, %p53
    %s55 = ssub.s32 %s14, %s26
    %s56 = ssub.s32 %s15, %s22
    %s57 = sor.u32 %s55, %s56
    %p58 = scmp.eq.s32.totalorder %s57, 0
    %s60 = sadd.s32 %s59, 1
    %s61 = scalar_select %p58, %s59, %s60
    %p64 = pneg %p58
    %p65 = scmp.eq.s32.totalorder %s7, 1
    %p66 = por %p64, %p65
    %p67 = scmp.ne.s32.totalorder %s59, %s62
    %p68 = scmp.eq.s32.totalorder %s7, 0
    %p69 = por %p67, %p68
    %p70 = scmp.ne.s32.totalorder %s59, %s62
    %p71 = scmp.eq.s32.totalorder %s12, 1
    %p72 = por %p70, %p71
    %p73 = scmp.ne.s32.totalorder %s62, %s63
    %p74 = scmp.eq.s32.totalorder %s12, 0
    %p75 = por %p73, %p74
    %p76 = scmp.ne.s32.totalorder %s62, %s63
    %p77 = scmp.eq.s32.totalorder %s13, 1
    %p78 = por %p76, %p77
    %p80 = scmp.ne.s32.totalorder %s63, %s79
    %p81 = scmp.eq.s32.totalorder %s13, 0
    %p82 = por %p80, %p81
    %p83 = scmp.le.s32.totalorder 1, %s7
    %p84 = scmp.lt.s32.totalorder %s7, 3
    %p85 = pnand %p83, %p84
    %p86 = pneg %p85
    // Predicated region
    $region9: #{down_forward.4} parent=5 // pred_check
      _
    $region10: #{down_forward.4} parent=5 // pred_check_branch
      %88 = sbr.rel (%p85) target = $region12
    $region11: #{down_forward.4} parent=5 // pred_region
      %s89 = ssub.s32 %s7, 1
    $region12: #{down_forward.4} parent=5 // pred_fallthru
      _
    %p90 = scmp.lt.s32.totalorder %s7, 2
    // Predicated region
    $region13: #{down_forward.4} parent=5 // pred_check
      %p91 = pneg %p90
    $region14: #{down_forward.4} parent=5 // pred_check_branch
      %93 = sbr.rel (%p91) target = $region16
    $region15: #{down_forward.4} parent=5 // pred_region
      // Predicated region
      $region17: #{down_forward.4} parent=15 // pred_check
        %p94 = pneg %p41
      $region18: #{down_forward.4} parent=15 // pred_check_branch
        %96 = sbr.rel (%p94) target = $region20
      $region19: #{down_forward.4} parent=15 // pred_region
        %s97 = smul.u32 8, %s15
        %p98 = scmp.lt.s32.totalorder %s14, 1
        %s99 = scalar_select %p98, %s14, 1
        %p100 = scmp.lt.s32.totalorder %s97, 7
        %s101 = scalar_select %p100, %s97, 7
        %s102 = smul.addr %s101, 2
        %s103 = smul.addr %s99, 16
        %s104 = sadd.s32 %s102, %s103
        %s105 = smul.addr %s104, 8
        %s106 = scalar_lea.vmem %s0, %s105
        %s107 = smul.u32 8, %s15
      $region20: #{down_forward.4} parent=15 // pred_fallthru
        _
    $region16: #{down_forward.4} parent=5 // pred_fallthru
      _
    %p108 = scmp.le.s32.totalorder 1, %s7
    %p109 = scmp.lt.s32.totalorder %s7, 3
    %p110 = pnand %p108, %p109
    %p111 = pneg %p110
    // Predicated region
    $region21: #{down_forward.4} parent=5 // pred_check
      _
    $region22: #{down_forward.4} parent=5 // pred_check_branch
      %113 = sbr.rel (%p110) target = $region24
    $region23: #{down_forward.4} parent=5 // pred_region
      %s114 = ssub.s32 %s7, 1
      %s115 = smul.u32 8, %s17
      %p116 = scmp.lt.s32.totalorder %s16, 1
      %s117 = scalar_select %p116, %s16, 1
      %p118 = scmp.lt.s32.totalorder %s115, 7
      %s119 = scalar_select %p118, %s115, 7
      %s120 = smul.addr %s119, 2
      %s121 = smul.addr %s117, 16
      %s122 = sadd.s32 %s120, %s121
      %s123 = smul.addr %s122, 8
      %s124 = scalar_lea.vmem %s0, %s123
      %p125 = pneg %p47
      %p126 = pneg %p44
      %p127 = pneg %p75
      %p128 = pneg %p72
      %s129 = smul.u32 8, %s17
      %p130 = scmp.lt.s32.totalorder %s16, 1
      %s131 = scalar_select %p130, %s16, 1
      %p132 = scmp.lt.s32.totalorder %s129, 7
      %s133 = scalar_select %p132, %s129, 7
      %s134 = smul.addr %s131, 8
      %s135 = sadd.s32 %s133, %s134
      %s136 = smul.addr %s135, 8
      %s137 = scalar_lea.vmem %s1, %s136
      %s138 = smul.u32 8, %s17
      %p139 = scmp.lt.s32.totalorder %s16, 1
      %s140 = scalar_select %p139, %s16, 1
      %p141 = scmp.lt.s32.totalorder %s138, 7
      %s142 = scalar_select %p141, %s138, 7
      %s143 = smul.addr %s142, 2
      %s144 = smul.addr %s140, 16
      %s145 = sadd.s32 %s143, %s144
      %s146 = smul.addr %s145, 8
      %s147 = scalar_lea.vmem %s0, %s146
      %s148 = smul.u32 8, %s17
      %s149 = smul.u32 8, %s17
      %p150 = scmp.lt.s32.totalorder %s16, 1
      %s151 = scalar_select %p150, %s16, 1
      %p152 = scmp.lt.s32.totalorder %s149, 7
      %s153 = scalar_select %p152, %s149, 7
      %s154 = smul.addr %s151, 8
      %s155 = sadd.s32 %s153, %s154
      %s156 = smul.addr %s155, 8
      %s157 = scalar_lea.vmem %s1, %s156
      %s158 = smul.u32 8, %s17
      %v159 = vld [vmem:[%s147] sm:$0xff]
      %v160 = vld [vmem:[%s147 + $0x8] sm:$0xff]
      %v161 = vld [vmem:[%s147 + $0x10] sm:$0xff]
      %v162 = vld [vmem:[%s147 + $0x18] sm:$0xff]
      %v163 = vld [vmem:[%s147 + $0x20] sm:$0xff]
      %v164 = vld [vmem:[%s147 + $0x28] sm:$0xff]
      %v165 = vld [vmem:[%s147 + $0x30] sm:$0xff]
      %v166 = vld [vmem:[%s147 + $0x38] sm:$0xff]
      %v167 = vld [vmem:[%s147 + $0x40] sm:$0xff]
      %v168 = vld [vmem:[%s147 + $0x48] sm:$0xff]
      %v169 = vld [vmem:[%s147 + $0x50] sm:$0xff]
      %v170 = vld [vmem:[%s147 + $0x58] sm:$0xff]
      %v171 = vld [vmem:[%s147 + $0x60] sm:$0xff]
      %v172 = vld [vmem:[%s147 + $0x68] sm:$0xff]
      %v173 = vld [vmem:[%s147 + $0x70] sm:$0xff]
      %v174 = vld [vmem:[%s147 + $0x78] sm:$0xff]
      %v175 = vmax.f32 %v159, %v160
      %v176 = vmax.f32 %v161, %v162
      %v177 = vmax.f32 %v163, %v164
      %v178 = vmax.f32 %v165, %v166
      %v179 = vmax.f32 %v167, %v168
      %v180 = vmax.f32 %v169, %v170
      %v181 = vmax.f32 %v171, %v172
      %v182 = vmax.f32 %v173, %v174
      %191 = vrot.lane.b32.xlu0 %v175, 124
      %v192 = vpop.permute.xlu0 %191
      %193 = vrot.lane.b32.xlu0 %v176, 124
      %v194 = vpop.permute.xlu0 %193
      %195 = vrot.lane.b32.xlu0 %v177, 124
      %v196 = vpop.permute.xlu0 %195
      %197 = vrot.lane.b32.xlu0 %v178, 124
      %v198 = vpop.permute.xlu0 %197
      %199 = vrot.lane.b32.xlu0 %v179, 124
      %v200 = vpop.permute.xlu0 %199
      %201 = vrot.lane.b32.xlu0 %v180, 124
      %v202 = vpop.permute.xlu0 %201
      %203 = vrot.lane.b32.xlu0 %v181, 124
      %v204 = vpop.permute.xlu0 %203
      %205 = vrot.lane.b32.xlu0 %v182, 124
      %v206 = vpop.permute.xlu0 %205
      %v215 = vmax.f32 %v175, %v192
      %v216 = vmax.f32 %v176, %v194
      %v217 = vmax.f32 %v177, %v196
      %v218 = vmax.f32 %v178, %v198
      %v219 = vmax.f32 %v179, %v200
      %v220 = vmax.f32 %v180, %v202
      %v221 = vmax.f32 %v181, %v204
      %v222 = vmax.f32 %v182, %v206
      %vm223 = vcmask 31744
      %224 = vst.msk [vmem:[%s157] sm:$0xff] %vm223, %v215
      %225 = vst.msk [vmem:[%s157 + $0x8] sm:$0xff] %vm223, %v216
      %226 = vst.msk [vmem:[%s157 + $0x10] sm:$0xff] %vm223, %v217
      %227 = vst.msk [vmem:[%s157 + $0x18] sm:$0xff] %vm223, %v218
      %228 = vst.msk [vmem:[%s157 + $0x20] sm:$0xff] %vm223, %v219
      %229 = vst.msk [vmem:[%s157 + $0x28] sm:$0xff] %vm223, %v220
      %230 = vst.msk [vmem:[%s157 + $0x30] sm:$0xff] %vm223, %v221
      %231 = vst.msk [vmem:[%s157 + $0x38] sm:$0xff] %vm223, %v222
      %s232 = smul.u32 8, %s17
      %p233 = scmp.lt.s32.totalorder %s16, 1
      %s234 = scalar_select %p233, %s16, 1
      %p235 = scmp.lt.s32.totalorder %s232, 7
      %s236 = scalar_select %p235, %s232, 7
      %s237 = smul.addr %s234, 8
      %s238 = sadd.s32 %s236, %s237
      %s239 = smul.addr %s238, 8
      %s240 = scalar_lea.vmem %s1, %s239
      // Predicated region
      $region25: #{down_forward.4} parent=23 // pred_check
        %p241 = pneg %p72
      $region26: #{down_forward.4} parent=23 // pred_check_branch
        %243 = sbr.rel (%p241) target = $region28
      $region27: #{down_forward.4} parent=23 // pred_region
        %s244 = smul.u32 8, %s17
      $region28: #{down_forward.4} parent=23 // pred_fallthru
        _
    $region24: #{down_forward.4} parent=5 // pred_fallthru
      _
    %p245 = scmp.le.s32.totalorder 2, %s7
    // Predicated region
    $region29: #{down_forward.4} parent=5 // pred_check
      %p246 = pneg %p245
    $region30: #{down_forward.4} parent=5 // pred_check_branch
      %248 = sbr.rel (%p246) target = $region32
    $region31: #{down_forward.4} parent=5 // pred_region
      %s249 = ssub.s32 %s7, 2
      // Predicated region
      $region33: #{down_forward.4} parent=31 // pred_check
        %p250 = pneg %p78
      $region34: #{down_forward.4} parent=31 // pred_check_branch
        %252 = sbr.rel (%p250) target = $region36
      $region35: #{down_forward.4} parent=31 // pred_region
        %s253 = smul.u32 8, %s19
        %p254 = scmp.lt.s32.totalorder %s18, 1
        %s255 = scalar_select %p254, %s18, 1
        %p256 = scmp.lt.s32.totalorder %s253, 7
        %s257 = scalar_select %p256, %s253, 7
        %s258 = smul.addr %s255, 8
        %s259 = sadd.s32 %s257, %s258
        %s260 = smul.addr %s259, 8
        %s261 = scalar_lea.vmem %s1, %s260
      $region36: #{down_forward.4} parent=31 // pred_fallthru
        _
    $region32: #{down_forward.4} parent=5 // pred_fallthru
      _
  $region6: #{down_forward.4} parent=0 // loop_footer
    %s11 = sadd.s32 1, %s7
  $region7: #{down_forward.4} parent=0 // loop_footer_branch
    %6 = sbr.rel target = $region3
  $region8: #{down_forward.4} parent=0 // loop_exit
    _

// kernel: down_forward.5
$region0: #{down_forward.5}
  #allocation0 [shape = 'u32[]', space=smem, size = 0x4, offset = 0x4, fixed_abs, tag = 'smem constant byte address 0x4 - core index']
  #allocation1 [shape = 'u32[144,128]{1,0:T(1,128)}', space=vmem, size = 0x12000, scoped, tag = 'internal scratch']
  %s0 = inlined_call_operand.vmem [shape: bf16[128,36], index: 0, kind: input, shape index: {}]
  %s1 = inlined_call_operand.vmem [shape: bf16[36,128], index: 1, kind: input, shape index: {}]
  %s2 = inlined_call_operand.vmem [shape: f32[128,128], index: 2, kind: output, shape index: {0}]
  %s3 = inlined_call_operand.vmem [shape: f32[2,1,128], index: 3, kind: output, shape index: {1}]
  %s4 = inlined_call_operand.vmem [shape: f32[2,1,128], index: 4, kind: output, shape index: {2}]
  %5 = xla_tuple %s2, %s3, %s4
  %s6 = sld [smem:[#allocation0]]
  $region57: #{down_forward.5} parent=0
    _
  %s8 = ssub.s32 1, %s6
  %s9 = scalar_select 0, %s8, %s6
  loop: start=0, step=1, limit=4
  $region2: #{down_forward.5} parent=0 // loop_pre_header
    _
  $region3: #{down_forward.5} parent=0 // loop_header
    %s11 = sphi 0, %s15
    %p12 = scmp.ge.s32.totalorder %s11, 4
    %s21 = sphi 0, %s23
    %s24 = sphi 0, %s21
    %s25 = sphi 0, %s24
    %s41 = sphi 0, %s25
    %s45 = sphi 0, %s45
    %s47 = sphi 0, %s45
    %s48 = sphi 0, %s47
    %s62 = sphi 0, %s48
    %s68 = sphi 0, %s70
    %s71 = sphi 0, %s68
    %s72 = sphi 0, %s71
    %s88 = sphi 0, %s72
    %s94 = sphi 0, %s96
    %s97 = sphi 0, %s94
    %s98 = sphi 0, %s97
    %s114 = sphi 0, %s98
    %s120 = sphi 0, %s122
    %s123 = sphi 0, %s120
    %s124 = sphi 0, %s123
    %s140 = sphi 0, %s124
  $region4: #{down_forward.5} parent=0 // loop_header_branch
    %14 = sbr.rel (%p12) target = $region8
  $region5: #{down_forward.5} parent=0 // loop_body
    %s16 = ssub.s32 %s11, 1
    %s17 = ssub.s32 %s11, 2
    %s18 = sadd.s32 %s11, 1
    %s19 = ssub.s32 %s11, %s18
    %p20 = scmp.eq.s32.totalorder %s19, 0
    %s22 = sadd.s32 %s21, 1
    %s23 = scalar_select %p20, %s21, %s22
    %p26 = pneg %p20
    %p27 = scmp.eq.s32.totalorder %s11, 1
    %p28 = por %p26, %p27
    %p29 = scmp.ne.s32.totalorder %s21, %s24
    %p30 = scmp.eq.s32.totalorder %s11, 0
    %p31 = por %p29, %p30
    %p32 = scmp.ne.s32.totalorder %s21, %s24
    %p33 = scmp.eq.s32.totalorder %s16, 1
    %p34 = por %p32, %p33
    %p35 = scmp.ne.s32.totalorder %s24, %s25
    %p36 = scmp.eq.s32.totalorder %s16, 0
    %p37 = por %p35, %p36
    %p38 = scmp.ne.s32.totalorder %s24, %s25
    %p39 = scmp.eq.s32.totalorder %s17, 1
    %p40 = por %p38, %p39
    %p42 = scmp.ne.s32.totalorder %s25, %s41
    %p43 = scmp.eq.s32.totalorder %s17, 0
    %p44 = por %p42, %p43
    %s46 = sadd.s32 %s45, 1
    %p49 = scmp.eq.s32.totalorder %s11, 1
    %p50 = scmp.ne.s32.totalorder %s45, %s47
    %p51 = scmp.eq.s32.totalorder %s11, 0
    %p52 = por %p50, %p51
    %p53 = scmp.ne.s32.totalorder %s45, %s47
    %p54 = scmp.eq.s32.totalorder %s16, 1
    %p55 = por %p53, %p54
    %p56 = scmp.ne.s32.totalorder %s47, %s48
    %p57 = scmp.eq.s32.totalorder %s16, 0
    %p58 = por %p56, %p57
    %p59 = scmp.ne.s32.totalorder %s47, %s48
    %p60 = scmp.eq.s32.totalorder %s17, 1
    %p61 = por %p59, %p60
    %p63 = scmp.ne.s32.totalorder %s48, %s62
    %p64 = scmp.eq.s32.totalorder %s17, 0
    %p65 = por %p63, %p64
    %s66 = ssub.s32 %s11, %s18
    %p67 = scmp.eq.s32.totalorder %s66, 0
    %s69 = sadd.s32 %s68, 1
    %s70 = scalar_select %p67, %s68, %s69
    %p73 = pneg %p67
    %p74 = scmp.eq.s32.totalorder %s11, 1
    %p75 = por %p73, %p74
    %p76 = scmp.ne.s32.totalorder %s68, %s71
    %p77 = scmp.eq.s32.totalorder %s11, 0
    %p78 = por %p76, %p77
    %p79 = scmp.ne.s32.totalorder %s68, %s71
    %p80 = scmp.eq.s32.totalorder %s16, 1
    %p81 = por %p79, %p80
    %p82 = scmp.ne.s32.totalorder %s71, %s72
    %p83 = scmp.eq.s32.totalorder %s16, 0
    %p84 = por %p82, %p83
    %p85 = scmp.ne.s32.totalorder %s71, %s72
    %p86 = scmp.eq.s32.totalorder %s17, 1
    %p87 = por %p85, %p86
    %p89 = scmp.ne.s32.totalorder %s72, %s88
    %p90 = scmp.eq.s32.totalorder %s17, 0
    %p91 = por %p89, %p90
    %s92 = ssub.s32 %s11, %s18
    %p93 = scmp.eq.s32.totalorder %s92, 0
    %s95 = sadd.s32 %s94, 1
    %s96 = scalar_select %p93, %s94, %s95
    %p99 = pneg %p93
    %p100 = scmp.eq.s32.totalorder %s11, 1
    %p101 = por %p99, %p100
    %p102 = scmp.ne.s32.totalorder %s94, %s97
    %p103 = scmp.eq.s32.totalorder %s11, 0
    %p104 = por %p102, %p103
    %p105 = scmp.ne.s32.totalorder %s94, %s97
    %p106 = scmp.eq.s32.totalorder %s16, 1
    %p107 = por %p105, %p106
    %p108 = scmp.ne.s32.totalorder %s97, %s98
    %p109 = scmp.eq.s32.totalorder %s16, 0
    %p110 = por %p108, %p109
    %p111 = scmp.ne.s32.totalorder %s97, %s98
    %p112 = scmp.eq.s32.totalorder %s17, 1
    %p113 = por %p111, %p112
    %p115 = scmp.ne.s32.totalorder %s98, %s114
    %p116 = scmp.eq.s32.totalorder %s17, 0
    %p117 = por %p115, %p116
    %s118 = ssub.s32 %s11, %s18
    %p119 = scmp.eq.s32.totalorder %s118, 0
    %s121 = sadd.s32 %s120, 1
    %s122 = scalar_select %p119, %s120, %s121
    %p125 = pneg %p119
    %p126 = scmp.eq.s32.totalorder %s11, 1
    %p127 = por %p125, %p126
    %p128 = scmp.ne.s32.totalorder %s120, %s123
    %p129 = scmp.eq.s32.totalorder %s11, 0
    %p130 = por %p128, %p129
    %p131 = scmp.ne.s32.totalorder %s120, %s123
    %p132 = scmp.eq.s32.totalorder %s16, 1
    %p133 = por %p131, %p132
    %p134 = scmp.ne.s32.totalorder %s123, %s124
    %p135 = scmp.eq.s32.totalorder %s16, 0
    %p136 = por %p134, %p135
    %p137 = scmp.ne.s32.totalorder %s123, %s124
    %p138 = scmp.eq.s32.totalorder %s17, 1
    %p139 = por %p137, %p138
    %p141 = scmp.ne.s32.totalorder %s124, %s140
    %p142 = scmp.eq.s32.totalorder %s17, 0
    %p143 = por %p141, %p142
    %p144 = scmp.le.s32.totalorder 1, %s11
    %p145 = scmp.lt.s32.totalorder %s11, 3
    %p146 = pnand %p144, %p145
    %p147 = pneg %p146
    // Predicated region
    $region9: #{down_forward.5} parent=5 // pred_check
      _
    $region10: #{down_forward.5} parent=5 // pred_check_branch
      %149 = sbr.rel (%p146) target = $region12
    $region11: #{down_forward.5} parent=5 // pred_region
      %s150 = ssub.s32 %s11, 1
      // Predicated region
      $region13: #{down_forward.5} parent=11 // pred_check
        %p151 = pneg %p58
      $region14: #{down_forward.5} parent=11 // pred_check_branch
        %153 = sbr.rel (%p151) target = $region16
      $region15: #{down_forward.5} parent=11 // pred_region
        _
      $region16: #{down_forward.5} parent=11 // pred_fallthru
        _
    $region12: #{down_forward.5} parent=5 // pred_fallthru
      _
    %p154 = scmp.lt.s32.totalorder %s11, 2
    // Predicated region
    $region17: #{down_forward.5} parent=5 // pred_check
      %p155 = pneg %p154
    $region18: #{down_forward.5} parent=5 // pred_check_branch
      %157 = sbr.rel (%p155) target = $region20
    $region19: #{down_forward.5} parent=5 // pred_region
      // Predicated region
      $region21: #{down_forward.5} parent=19 // pred_check
        %p158 = pneg %p31
      $region22: #{down_forward.5} parent=19 // pred_check_branch
        %160 = sbr.rel (%p158) target = $region24
      $region23: #{down_forward.5} parent=19 // pred_region
        %s161 = smul.u32 8, %s11
        %p162 = scmp.lt.s32.totalorder %s161, 15
        %s163 = scalar_select %p162, %s161, 15
        %s164 = smul.addr %s163, 4
        %s165 = scalar_lea.vmem %s0, %s164
        %s166 = smul.u32 8, %s11
      $region24: #{down_forward.5} parent=19 // pred_fallthru
        _
    $region20: #{down_forward.5} parent=5 // pred_fallthru
      _
    %p167 = scmp.le.s32.totalorder 1, %s11
    %p168 = scmp.lt.s32.totalorder %s11, 3
    %p169 = pnand %p167, %p168
    %p170 = pneg %p169
    // Predicated region
    $region25: #{down_forward.5} parent=5 // pred_check
      _
    $region26: #{down_forward.5} parent=5 // pred_check_branch
      %172 = sbr.rel (%p169) target = $region28
    $region27: #{down_forward.5} parent=5 // pred_region
      %s173 = ssub.s32 %s11, 1
      %s174 = smul.u32 8, %s16
      %p175 = scmp.lt.s32.totalorder %s174, 15
      %s176 = scalar_select %p175, %s174, 15
      %s177 = smul.addr %s176, 4
      %s178 = scalar_lea.vmem %s0, %s177
      %p179 = pneg %p37
      %p180 = pneg %p34
      %p181 = pneg %p58
      %p182 = pneg %p55
      %p183 = pneg %p84
      %p184 = pneg %p81
      %s185 = smul.u32 8, %s16
      %p186 = scmp.lt.s32.totalorder %s185, 15
      %s187 = scalar_select %p186, %s185, 15
      %s188 = smul.addr %s187, 8
      %s189 = scalar_lea.vmem %s2, %s188
      %p190 = pneg %p110
      %p191 = pneg %p107
      %p192 = scmp.lt.s32.totalorder %s16, 1
      %s193 = scalar_select %p192, %s16, 1
      %s194 = scalar_lea.vmem %s3, %s193
      %p195 = pneg %p136
      %p196 = pneg %p133
      %p197 = scmp.lt.s32.totalorder %s16, 1
      %s198 = scalar_select %p197, %s16, 1
      %s199 = scalar_lea.vmem %s4, %s198
      %s200 = smul.u32 8, %s16
      %p201 = scmp.lt.s32.totalorder %s200, 15
      %s202 = scalar_select %p201, %s200, 15
      %s203 = smul.addr %s202, 4
      %s204 = scalar_lea.vmem %s0, %s203
      %s205 = smul.u32 8, %s16
      %s206 = smul.u32 8, %s16
      %p207 = scmp.lt.s32.totalorder %s206, 15
      %s208 = scalar_select %p207, %s206, 15
      %s209 = smul.addr %s208, 8
      %s210 = scalar_lea.vmem %s2, %s209
      %s211 = smul.u32 8, %s16
      %p212 = scmp.lt.s32.totalorder %s16, 1
      %s213 = scalar_select %p212, %s16, 1
      %s214 = scalar_lea.vmem %s3, %s213
      %p215 = scmp.lt.s32.totalorder %s16, 1
      %s216 = scalar_select %p215, %s16, 1
      %s217 = scalar_lea.vmem %s4, %s216
      %v219 = vld [vmem:[%s204] sm:$0xf]
      %v220 = vld [vmem:[%s204 + $0x4] sm:$0xf]
      %v221 = vld [vmem:[%s204 + $0x8] sm:$0xf]
      %v222 = vld [vmem:[%s204 + $0xc] sm:$0xf]
      %v223 = vld [vmem:[%s204 + $0x10] sm:$0xf]
      %v224 = vld [vmem:[%s204 + $0x14] sm:$0xf]
      %v225 = vld [vmem:[%s204 + $0x18] sm:$0xf]
      %v226 = vld [vmem:[%s204 + $0x1c] sm:$0xf]
      %v227 = vld [vmem:[%s1] sm:$0xf]
      %v228 = vld [vmem:[%s1 + $0x4] sm:$0xf]
      %v229 = vld [vmem:[%s1 + $0x8] sm:$0xf]
      %v230 = vld [vmem:[%s1 + $0xc] sm:$0xf]
      %v231 = vld [vmem:[%s1 + $0x10] sm:$0x3]
      %v240 = vunpack.c.l.b16 %v219
      %v241 = vunpack.c.l.b16 %v220
      %v242 = vunpack.c.l.b16 %v221
      %v243 = vunpack.c.l.b16 %v222
      %v244 = vunpack.c.l.b16 %v223
      %v245 = vunpack.c.l.b16 %v224
      %v246 = vunpack.c.l.b16 %v225
      %v247 = vunpack.c.l.b16 %v226
      %v248 = vpack.c.b16 %v241, %v240
      %v249 = vpack.c.b16 %v243, %v242
      %v250 = vpack.c.b16 %v245, %v244
      %v251 = vpack.c.b16 %v247, %v246
      %v257 = vunpack.c.l.b16 %v227
      %v258 = vunpack.c.l.b16 %v228
      %v259 = vunpack.c.l.b16 %v229
      %v260 = vunpack.c.l.b16 %v230
      %v261 = vunpack.c.l.b16 %v231
      %v262 = vpack.c.b16 %v258, %v257
      %v263 = vpack.c.b16 %v260, %v259
      %v264 = vpack.c.b16 %v261, %v261
      %vm267 = vcmask 293888
      %v269 = vsel %vm267, %v248, 0
      %v272 = vsel %vm267, %v249, 0
      %v275 = vsel %vm267, %v250, 0
      %v278 = vsel %vm267, %v251, 0
      %vm280 = vcmask 1041408
      %v282 = vsel %vm280, %v264, 0
      %284 = vmatprep.subr.bf16.mxu0 0
      %285 = vmatpush1.bf16.msra.mxu0 0
      %286 = vmatprep.subr.bf16.mxu0 0
      %287 = vmatpush1.bf16.msra.mxu0 0
      %288 = vmatprep.subr.bf16.mxu0 0
      %289 = vmatpush1.bf16.msra.mxu0 0
      %290 = vmatprep.subr.bf16.mxu0 0
      %291 = vmatpush1.bf16.msra.mxu0 0
      %292 = vmatprep.subr.bf16.mxu0 0
      %293 = vmatpush1.bf16.msra.mxu0 0
      %294 = vmatprep.subr.bf16.mxu0 0
      %295 = vmatpush1.bf16.msra.mxu0 %v282
      %296 = vmatprep.subr.bf16.mxu0 0
      %297 = vmatpush1.bf16.msra.mxu0 %v263
      %298 = vmatprep.subr.bf16.mxu0 0
      %299 = vmatpush1.bf16.msra.mxu0 %v262
      %300 = vmatprep.subr.bf16.mxu0 0
      %301 = vmatpush2.bf16.msra.mxu0 0
      %302 = vmatprep.subr.bf16.mxu0 0
      %303 = vmatpush2.bf16.msra.mxu0 0
      %304 = vmatprep.subr.bf16.mxu0 0
      %305 = vmatpush2.bf16.msra.mxu0 0
      %306 = vmatprep.subr.bf16.mxu0 0
      %307 = vmatpush2.bf16.msra.mxu0 0
      %308 = vmatprep.subr.bf16.mxu0 0
      %309 = vmatpush2.bf16.msra.mxu0 0
      %310 = vmatprep.subr.bf16.mxu0 0
      %311 = vmatpush2.bf16.msra.mxu0 0
      %312 = vmatprep.subr.bf16.mxu0 0
      %313 = vmatpush2.bf16.msra.mxu0 0
      %314 = vmatprep.subr.bf16.mxu0 0
      %315 = vmatpush2.bf16.msra.mxu0 0
      %316 = vmatprep.mubr.bf16.mxu0 0
      %317 = vmatmul.mubr.bf16.gmra.mxu0 %v269
      %v318 = vpop.f32.mrf.mxu0
      %v319 = vadd.f32 0.0, %v318
      %v320 = vpop.f32.mrf.mxu0
      %v321 = vpop.f32.mrf.mxu0
      %v322 = vadd.f32 0.0, %v321
      %v323 = vpop.f32.mrf.mxu0
      %324 = vmatprep.mubr.bf16.mxu0 0
      %325 = vmatmul.mubr.bf16.gmra.mxu0 %v272
      %v326 = vpop.f32.mrf.mxu0
      %v327 = vadd.f32 0.0, %v326
      %v328 = vpop.f32.mrf.mxu0
      %v329 = vpop.f32.mrf.mxu0
      %v330 = vadd.f32 0.0, %v329
      %v331 = vpop.f32.mrf.mxu0
      %332 = vmatprep.mubr.bf16.mxu0 0
      %333 = vmatmul.mubr.bf16.gmra.mxu0 %v275
      %v334 = vpop.f32.mrf.mxu0
      %v335 = vadd.f32 0.0, %v334
      %v336 = vpop.f32.mrf.mxu0
      %v337 = vpop.f32.mrf.mxu0
      %v338 = vadd.f32 0.0, %v337
      %v339 = vpop.f32.mrf.mxu0
      %340 = vmatprep.mubr.bf16.mxu0 0
      %341 = vmatmul.mubr.bf16.gmra.mxu0 %v278
      %v342 = vpop.f32.mrf.mxu0
      %v343 = vadd.f32 0.0, %v342
      %v344 = vpop.f32.mrf.mxu0
      %v345 = vpop.f32.mrf.mxu0
      %v346 = vadd.f32 0.0, %v345
      %v347 = vpop.f32.mrf.mxu0
      %348 = vdwg.mxu0
      %349 = vst [vmem:[%s210] sm:$0xff] %v319
      %350 = vst [vmem:[%s210 + $0x8] sm:$0xff] %v322
      %351 = vst [vmem:[%s210 + $0x10] sm:$0xff] %v327
      %352 = vst [vmem:[%s210 + $0x18] sm:$0xff] %v330
      %353 = vst [vmem:[%s210 + $0x20] sm:$0xff] %v335
      %354 = vst [vmem:[%s210 + $0x28] sm:$0xff] %v338
      %355 = vst [vmem:[%s210 + $0x30] sm:$0xff] %v343
      %356 = vst [vmem:[%s210 + $0x38] sm:$0xff] %v346
      %v357 = vadd.f32 %v319, %v322
      %v358 = vadd.f32 %v357, %v327
      %v359 = vadd.f32 %v358, %v330
      %v360 = vadd.f32 %v359, %v335
      %v361 = vadd.f32 %v360, %v338
      %v362 = vadd.f32 %v361, %v343
      %v363 = vadd.f32 %v362, %v346
      %v364 = vrot.slane %v363, 4
      %v365 = vadd.f32 %v363, %v364
      %v366 = vrot.slane %v365, 2
      %v367 = vadd.f32 %v365, %v366
      %v368 = vrot.slane %v367, 1
      %v369 = vadd.f32 %v367, %v368
      %370 = vst [vmem:[%s214] sm:$0x1] %v369
      %v371 = vmul.f32 %v319, %v319
      %v372 = vmul.f32 %v322, %v322
      %v373 = vmul.f32 %v327, %v327
      %v374 = vmul.f32 %v330, %v330
      %v375 = vmul.f32 %v335, %v335
      %v376 = vmul.f32 %v338, %v338
      %v377 = vmul.f32 %v343, %v343
      %v378 = vmul.f32 %v346, %v346
      %v379 = vadd.f32 %v371, %v372
      %v380 = vadd.f32 %v379, %v373
      %v381 = vadd.f32 %v380, %v374
      %v382 = vadd.f32 %v381, %v375
      %v383 = vadd.f32 %v382, %v376
      %v384 = vadd.f32 %v383, %v377
      %v385 = vadd.f32 %v384, %v378
      %v386 = vrot.slane %v385, 4
      %v387 = vadd.f32 %v385, %v386
      %v388 = vrot.slane %v387, 2
      %v389 = vadd.f32 %v387, %v388
      %v390 = vrot.slane %v389, 1
      %v391 = vadd.f32 %v389, %v390
      %392 = vst [vmem:[%s217] sm:$0x1] %v391
      %s393 = smul.u32 8, %s16
      %p394 = scmp.lt.s32.totalorder %s393, 15
      %s395 = scalar_select %p394, %s393, 15
      %s396 = smul.addr %s395, 8
      %s397 = scalar_lea.vmem %s2, %s396
      %p398 = scmp.lt.s32.totalorder %s16, 1
      %s399 = scalar_select %p398, %s16, 1
      %s400 = scalar_lea.vmem %s3, %s399
      %p401 = scmp.lt.s32.totalorder %s16, 1
      %s402 = scalar_select %p401, %s16, 1
      %s403 = scalar_lea.vmem %s4, %s402
      // Predicated region
      $region29: #{down_forward.5} parent=27 // pred_check
        %p404 = pneg %p81
      $region30: #{down_forward.5} parent=27 // pred_check_branch
        %406 = sbr.rel (%p404) target = $region32
      $region31: #{down_forward.5} parent=27 // pred_region
        %s407 = smul.u32 8, %s16
      $region32: #{down_forward.5} parent=27 // pred_fallthru
        _
      // Predicated region
      $region33: #{down_forward.5} parent=27 // pred_check
        %p408 = pneg %p107
      $region34: #{down_forward.5} parent=27 // pred_check_branch
        %410 = sbr.rel (%p408) target = $region36
      $region35: #{down_forward.5} parent=27 // pred_region
        _
      $region36: #{down_forward.5} parent=27 // pred_fallthru
        _
      // Predicated region
      $region37: #{down_forward.5} parent=27 // pred_check
        %p411 = pneg %p133
      $region38: #{down_forward.5} parent=27 // pred_check_branch
        %413 = sbr.rel (%p411) target = $region40
      $region39: #{down_forward.5} parent=27 // pred_region
        _
      $region40: #{down_forward.5} parent=27 // pred_fallthru
        _
    $region28: #{down_forward.5} parent=5 // pred_fallthru
      _
    %p414 = scmp.le.s32.totalorder 2, %s11
    // Predicated region
    $region41: #{down_forward.5} parent=5 // pred_check
      %p415 = pneg %p414
    $region42: #{down_forward.5} parent=5 // pred_check_branch
      %417 = sbr.rel (%p415) target = $region44
    $region43: #{down_forward.5} parent=5 // pred_region
      %s418 = ssub.s32 %s11, 2
      // Predicated region
      $region45: #{down_forward.5} parent=43 // pred_check
        %p419 = pneg %p87
      $region46: #{down_forward.5} parent=43 // pred_check_branch
        %421 = sbr.rel (%p419) target = $region48
      $region47: #{down_forward.5} parent=43 // pred_region
        %s422 = smul.u32 8, %s17
        %p423 = scmp.lt.s32.totalorder %s422, 15
        %s424 = scalar_select %p423, %s422, 15
        %s425 = smul.addr %s424, 8
        %s426 = scalar_lea.vmem %s2, %s425
      $region48: #{down_forward.5} parent=43 // pred_fallthru
        _
      // Predicated region
      $region49: #{down_forward.5} parent=43 // pred_check
        %p427 = pneg %p113
      $region50: #{down_forward.5} parent=43 // pred_check_branch
        %429 = sbr.rel (%p427) target = $region52
      $region51: #{down_forward.5} parent=43 // pred_region
        %p430 = scmp.lt.s32.totalorder %s17, 1
        %s431 = scalar_select %p430, %s17, 1
        %s432 = scalar_lea.vmem %s3, %s431
      $region52: #{down_forward.5} parent=43 // pred_fallthru
        _
      // Predicated region
      $region53: #{down_forward.5} parent=43 // pred_check
        %p433 = pneg %p139
      $region54: #{down_forward.5} parent=43 // pred_check_branch
        %435 = sbr.rel (%p433) target = $region56
      $region55: #{down_forward.5} parent=43 // pred_region
        %p436 = scmp.lt.s32.totalorder %s17, 1
        %s437 = scalar_select %p436, %s17, 1
        %s438 = scalar_lea.vmem %s4, %s437
      $region56: #{down_forward.5} parent=43 // pred_fallthru
        _
    $region44: #{down_forward.5} parent=5 // pred_fallthru
      _
  $region6: #{down_forward.5} parent=0 // loop_footer
    %s15 = sadd.s32 1, %s11
  $region7: #{down_forward.5} parent=0 // loop_footer_branch
    %10 = sbr.rel target = $region3
  $region8: #{down_forward.5} parent=0 // loop_exit
    _

// kernel: down_forward.6
$region0: #{down_forward.6}
  #allocation0 [shape = 'u32[]', space=smem, size = 0x4, offset = 0x4, fixed_abs, tag = 'smem constant byte address 0x4 - core index']
  #allocation1 [shape = 'u32[144,128]{1,0:T(1,128)}', space=vmem, size = 0x12000, scoped, tag = 'internal scratch']
  %s0 = inlined_call_operand.vmem [shape: bf16[128,1152], index: 0, kind: input, shape index: {}]
  %s1 = inlined_call_operand.vmem [shape: bf16[1152,128], index: 1, kind: input, shape index: {}]
  %s2 = inlined_call_operand.vmem [shape: f32[128,128], index: 2, kind: output, shape index: {0}]
  %s3 = inlined_call_operand.vmem [shape: f32[2,1,128], index: 3, kind: output, shape index: {1}]
  %s4 = inlined_call_operand.vmem [shape: f32[2,1,128], index: 4, kind: output, shape index: {2}]
  %5 = xla_tuple %s2, %s3, %s4
  %s6 = sld [smem:[#allocation0]]
  $region57: #{down_forward.6} parent=0
    _
  %s8 = ssub.s32 1, %s6
  %s9 = scalar_select 0, %s8, %s6
  loop: start=0, step=1, limit=4
  $region2: #{down_forward.6} parent=0 // loop_pre_header
    _
  $region3: #{down_forward.6} parent=0 // loop_header
    %s11 = sphi 0, %s15
    %p12 = scmp.ge.s32.totalorder %s11, 4
    %s21 = sphi 0, %s23
    %s24 = sphi 0, %s21
    %s25 = sphi 0, %s24
    %s41 = sphi 0, %s25
    %s45 = sphi 0, %s45
    %s47 = sphi 0, %s45
    %s48 = sphi 0, %s47
    %s62 = sphi 0, %s48
    %s68 = sphi 0, %s70
    %s71 = sphi 0, %s68
    %s72 = sphi 0, %s71
    %s88 = sphi 0, %s72
    %s94 = sphi 0, %s96
    %s97 = sphi 0, %s94
    %s98 = sphi 0, %s97
    %s114 = sphi 0, %s98
    %s120 = sphi 0, %s122
    %s123 = sphi 0, %s120
    %s124 = sphi 0, %s123
    %s140 = sphi 0, %s124
  $region4: #{down_forward.6} parent=0 // loop_header_branch
    %14 = sbr.rel (%p12) target = $region8
  $region5: #{down_forward.6} parent=0 // loop_body
    %s16 = ssub.s32 %s11, 1
    %s17 = ssub.s32 %s11, 2
    %s18 = sadd.s32 %s11, 1
    %s19 = ssub.s32 %s11, %s18
    %p20 = scmp.eq.s32.totalorder %s19, 0
    %s22 = sadd.s32 %s21, 1
    %s23 = scalar_select %p20, %s21, %s22
    %p26 = pneg %p20
    %p27 = scmp.eq.s32.totalorder %s11, 1
    %p28 = por %p26, %p27
    %p29 = scmp.ne.s32.totalorder %s21, %s24
    %p30 = scmp.eq.s32.totalorder %s11, 0
    %p31 = por %p29, %p30
    %p32 = scmp.ne.s32.totalorder %s21, %s24
    %p33 = scmp.eq.s32.totalorder %s16, 1
    %p34 = por %p32, %p33
    %p35 = scmp.ne.s32.totalorder %s24, %s25
    %p36 = scmp.eq.s32.totalorder %s16, 0
    %p37 = por %p35, %p36
    %p38 = scmp.ne.s32.totalorder %s24, %s25
    %p39 = scmp.eq.s32.totalorder %s17, 1
    %p40 = por %p38, %p39
    %p42 = scmp.ne.s32.totalorder %s25, %s41
    %p43 = scmp.eq.s32.totalorder %s17, 0
    %p44 = por %p42, %p43
    %s46 = sadd.s32 %s45, 1
    %p49 = scmp.eq.s32.totalorder %s11, 1
    %p50 = scmp.ne.s32.totalorder %s45, %s47
    %p51 = scmp.eq.s32.totalorder %s11, 0
    %p52 = por %p50, %p51
    %p53 = scmp.ne.s32.totalorder %s45, %s47
    %p54 = scmp.eq.s32.totalorder %s16, 1
    %p55 = por %p53, %p54
    %p56 = scmp.ne.s32.totalorder %s47, %s48
    %p57 = scmp.eq.s32.totalorder %s16, 0
    %p58 = por %p56, %p57
    %p59 = scmp.ne.s32.totalorder %s47, %s48
    %p60 = scmp.eq.s32.totalorder %s17, 1
    %p61 = por %p59, %p60
    %p63 = scmp.ne.s32.totalorder %s48, %s62
    %p64 = scmp.eq.s32.totalorder %s17, 0
    %p65 = por %p63, %p64
    %s66 = ssub.s32 %s11, %s18
    %p67 = scmp.eq.s32.totalorder %s66, 0
    %s69 = sadd.s32 %s68, 1
    %s70 = scalar_select %p67, %s68, %s69
    %p73 = pneg %p67
    %p74 = scmp.eq.s32.totalorder %s11, 1
    %p75 = por %p73, %p74
    %p76 = scmp.ne.s32.totalorder %s68, %s71
    %p77 = scmp.eq.s32.totalorder %s11, 0
    %p78 = por %p76, %p77
    %p79 = scmp.ne.s32.totalorder %s68, %s71
    %p80 = scmp.eq.s32.totalorder %s16, 1
    %p81 = por %p79, %p80
    %p82 = scmp.ne.s32.totalorder %s71, %s72
    %p83 = scmp.eq.s32.totalorder %s16, 0
    %p84 = por %p82, %p83
    %p85 = scmp.ne.s32.totalorder %s71, %s72
    %p86 = scmp.eq.s32.totalorder %s17, 1
    %p87 = por %p85, %p86
    %p89 = scmp.ne.s32.totalorder %s72, %s88
    %p90 = scmp.eq.s32.totalorder %s17, 0
    %p91 = por %p89, %p90
    %s92 = ssub.s32 %s11, %s18
    %p93 = scmp.eq.s32.totalorder %s92, 0
    %s95 = sadd.s32 %s94, 1
    %s96 = scalar_select %p93, %s94, %s95
    %p99 = pneg %p93
    %p100 = scmp.eq.s32.totalorder %s11, 1
    %p101 = por %p99, %p100
    %p102 = scmp.ne.s32.totalorder %s94, %s97
    %p103 = scmp.eq.s32.totalorder %s11, 0
    %p104 = por %p102, %p103
    %p105 = scmp.ne.s32.totalorder %s94, %s97
    %p106 = scmp.eq.s32.totalorder %s16, 1
    %p107 = por %p105, %p106
    %p108 = scmp.ne.s32.totalorder %s97, %s98
    %p109 = scmp.eq.s32.totalorder %s16, 0
    %p110 = por %p108, %p109
    %p111 = scmp.ne.s32.totalorder %s97, %s98
    %p112 = scmp.eq.s32.totalorder %s17, 1
    %p113 = por %p111, %p112
    %p115 = scmp.ne.s32.totalorder %s98, %s114
    %p116 = scmp.eq.s32.totalorder %s17, 0
    %p117 = por %p115, %p116
    %s118 = ssub.s32 %s11, %s18
    %p119 = scmp.eq.s32.totalorder %s118, 0
    %s121 = sadd.s32 %s120, 1
    %s122 = scalar_select %p119, %s120, %s121
    %p125 = pneg %p119
    %p126 = scmp.eq.s32.totalorder %s11, 1
    %p127 = por %p125, %p126
    %p128 = scmp.ne.s32.totalorder %s120, %s123
    %p129 = scmp.eq.s32.totalorder %s11, 0
    %p130 = por %p128, %p129
    %p131 = scmp.ne.s32.totalorder %s120, %s123
    %p132 = scmp.eq.s32.totalorder %s16, 1
    %p133 = por %p131, %p132
    %p134 = scmp.ne.s32.totalorder %s123, %s124
    %p135 = scmp.eq.s32.totalorder %s16, 0
    %p136 = por %p134, %p135
    %p137 = scmp.ne.s32.totalorder %s123, %s124
    %p138 = scmp.eq.s32.totalorder %s17, 1
    %p139 = por %p137, %p138
    %p141 = scmp.ne.s32.totalorder %s124, %s140
    %p142 = scmp.eq.s32.totalorder %s17, 0
    %p143 = por %p141, %p142
    %p144 = scmp.le.s32.totalorder 1, %s11
    %p145 = scmp.lt.s32.totalorder %s11, 3
    %p146 = pnand %p144, %p145
    %p147 = pneg %p146
    // Predicated region
    $region9: #{down_forward.6} parent=5 // pred_check
      _
    $region10: #{down_forward.6} parent=5 // pred_check_branch
      %149 = sbr.rel (%p146) target = $region12
    $region11: #{down_forward.6} parent=5 // pred_region
      %s150 = ssub.s32 %s11, 1
      // Predicated region
      $region13: #{down_forward.6} parent=11 // pred_check
        %p151 = pneg %p58
      $region14: #{down_forward.6} parent=11 // pred_check_branch
        %153 = sbr.rel (%p151) target = $region16
      $region15: #{down_forward.6} parent=11 // pred_region
        _
      $region16: #{down_forward.6} parent=11 // pred_fallthru
        _
    $region12: #{down_forward.6} parent=5 // pred_fallthru
      _
    %p154 = scmp.lt.s32.totalorder %s11, 2
    // Predicated region
    $region17: #{down_forward.6} parent=5 // pred_check
      %p155 = pneg %p154
    $region18: #{down_forward.6} parent=5 // pred_check_branch
      %157 = sbr.rel (%p155) target = $region20
    $region19: #{down_forward.6} parent=5 // pred_region
      // Predicated region
      $region21: #{down_forward.6} parent=19 // pred_check
        %p158 = pneg %p31
      $region22: #{down_forward.6} parent=19 // pred_check_branch
        %160 = sbr.rel (%p158) target = $region24
      $region23: #{down_forward.6} parent=19 // pred_region
        %s161 = smul.u32 8, %s11
        %p162 = scmp.lt.s32.totalorder %s161, 15
        %s163 = scalar_select %p162, %s161, 15
        %s164 = smul.addr %s163, 9
        %s165 = smul.addr %s164, 4
        %s166 = scalar_lea.vmem %s0, %s165
        %s167 = smul.u32 8, %s11
      $region24: #{down_forward.6} parent=19 // pred_fallthru
        _
    $region20: #{down_forward.6} parent=5 // pred_fallthru
      _
    %p168 = scmp.le.s32.totalorder 1, %s11
    %p169 = scmp.lt.s32.totalorder %s11, 3
    %p170 = pnand %p168, %p169
    %p171 = pneg %p170
    // Predicated region
    $region25: #{down_forward.6} parent=5 // pred_check
      _
    $region26: #{down_forward.6} parent=5 // pred_check_branch
      %173 = sbr.rel (%p170) target = $region28
    $region27: #{down_forward.6} parent=5 // pred_region
      %s174 = ssub.s32 %s11, 1
      %s175 = smul.u32 8, %s16
      %p176 = scmp.lt.s32.totalorder %s175, 15
      %s177 = scalar_select %p176, %s175, 15
      %s178 = smul.addr %s177, 9
      %s179 = smul.addr %s178, 4
      %s180 = scalar_lea.vmem %s0, %s179
      %p181 = pneg %p37
      %p182 = pneg %p34
      %p183 = pneg %p58
      %p184 = pneg %p55
      %p185 = pneg %p84
      %p186 = pneg %p81
      %s187 = smul.u32 8, %s16
      %p188 = scmp.lt.s32.totalorder %s187, 15
      %s189 = scalar_select %p188, %s187, 15
      %s190 = smul.addr %s189, 8
      %s191 = scalar_lea.vmem %s2, %s190
      %p192 = pneg %p110
      %p193 = pneg %p107
      %p194 = scmp.lt.s32.totalorder %s16, 1
      %s195 = scalar_select %p194, %s16, 1
      %s196 = scalar_lea.vmem %s3, %s195
      %p197 = pneg %p136
      %p198 = pneg %p133
      %p199 = scmp.lt.s32.totalorder %s16, 1
      %s200 = scalar_select %p199, %s16, 1
      %s201 = scalar_lea.vmem %s4, %s200
      %s202 = smul.u32 8, %s16
      %p203 = scmp.lt.s32.totalorder %s202, 15
      %s204 = scalar_select %p203, %s202, 15
      %s205 = smul.addr %s204, 9
      %s206 = smul.addr %s205, 4
      %s207 = scalar_lea.vmem %s0, %s206
      %s208 = smul.u32 8, %s16
      %s209 = smul.u32 8, %s16
      %p210 = scmp.lt.s32.totalorder %s209, 15
      %s211 = scalar_select %p210, %s209, 15
      %s212 = smul.addr %s211, 8
      %s213 = scalar_lea.vmem %s2, %s212
      %s214 = smul.u32 8, %s16
      %p215 = scmp.lt.s32.totalorder %s16, 1
      %s216 = scalar_select %p215, %s16, 1
      %s217 = scalar_lea.vmem %s3, %s216
      %p218 = scmp.lt.s32.totalorder %s16, 1
      %s219 = scalar_select %p218, %s16, 1
      %s220 = scalar_lea.vmem %s4, %s219
      %v222 = vld [vmem:[%s207] sm:$0xff]
      %v223 = vld [vmem:[%s207 + $0x8] sm:$0xff]
      %v224 = vld [vmem:[%s207 + $0x10] sm:$0xff]
      %v225 = vld [vmem:[%s207 + $0x18] sm:$0xff]
      %v226 = vld [vmem:[%s207 + $0x20] sm:$0xf]
      %v227 = vld [vmem:[%s207 + $0x24] sm:$0xff]
      %v228 = vld [vmem:[%s207 + $0x2c] sm:$0xff]
      %v229 = vld [vmem:[%s207 + $0x34] sm:$0xff]
      %v230 = vld [vmem:[%s207 + $0x3c] sm:$0xff]
      %v231 = vld [vmem:[%s207 + $0x44] sm:$0xf]
      %v232 = vld [vmem:[%s207 + $0x48] sm:$0xff]
      %v233 = vld [vmem:[%s207 + $0x50] sm:$0xff]
      %v234 = vld [vmem:[%s207 + $0x58] sm:$0xff]
      %v235 = vld [vmem:[%s207 + $0x60] sm:$0xff]
      %v236 = vld [vmem:[%s207 + $0x68] sm:$0xf]
      %v237 = vld [vmem:[%s207 + $0x6c] sm:$0xff]
      %v238 = vld [vmem:[%s207 + $0x74] sm:$0xff]
      %v239 = vld [vmem:[%s207 + $0x7c] sm:$0xff]
      %v240 = vld [vmem:[%s207 + $0x84] sm:$0xff]
      %v241 = vld [vmem:[%s207 + $0x8c] sm:$0xf]
      %v242 = vld [vmem:[%s207 + $0x90] sm:$0xff]
      %v243 = vld [vmem:[%s207 + $0x98] sm:$0xff]
      %v244 = vld [vmem:[%s207 + $0xa0] sm:$0xff]
      %v245 = vld [vmem:[%s207 + $0xa8] sm:$0xff]
      %v246 = vld [vmem:[%s207 + $0xb0] sm:$0xf]
      %v247 = vld [vmem:[%s207 + $0xb4] sm:$0xff]
      %v248 = vld [vmem:[%s207 + $0xbc] sm:$0xff]
      %v249 = vld [vmem:[%s207 + $0xc4] sm:$0xff]
      %v250 = vld [vmem:[%s207 + $0xcc] sm:$0xff]
      %v251 = vld [vmem:[%s207 + $0xd4] sm:$0xf]
      %v252 = vld [vmem:[%s207 + $0xd8] sm:$0xff]
      %v253 = vld [vmem:[%s207 + $0xe0] sm:$0xff]
      %v254 = vld [vmem:[%s207 + $0xe8] sm:$0xff]
      %v255 = vld [vmem:[%s207 + $0xf0] sm:$0xff]
      %v256 = vld [vmem:[%s207 + $0xf8] sm:$0xf]
      %v257 = vld [vmem:[%s207 + $0xfc] sm:$0xff]
      %v258 = vld [vmem:[%s207 + $0x104] sm:$0xff]
      %v259 = vld [vmem:[%s207 + $0x10c] sm:$0xff]
      %v260 = vld [vmem:[%s207 + $0x114] sm:$0xff]
      %v261 = vld [vmem:[%s207 + $0x11c] sm:$0xf]
      %v262 = vld [vmem:[%s1] sm:$0xf]
      %v263 = vld [vmem:[%s1 + $0x4] sm:$0xf]
      %v264 = vld [vmem:[%s1 + $0x8] sm:$0xf]
      %v265 = vld [vmem:[%s1 + $0xc] sm:$0xf]
      %v266 = vld [vmem:[%s1 + $0x10] sm:$0xf]
      %v267 = vld [vmem:[%s1 + $0x14] sm:$0xf]
      %v268 = vld [vmem:[%s1 + $0x18] sm:$0xf]
      %v269 = vld [vmem:[%s1 + $0x1c] sm:$0xf]
      %v270 = vld [vmem:[%s1 + $0x20] sm:$0xf]
      %v271 = vld [vmem:[%s1 + $0x24] sm:$0xf]
      %v272 = vld [vmem:[%s1 + $0x28] sm:$0xf]
      %v273 = vld [vmem:[%s1 + $0x2c] sm:$0xf]
      %v274 = vld [vmem:[%s1 + $0x30] sm:$0xf]
      %v275 = vld [vmem:[%s1 + $0x34] sm:$0xf]
      %v276 = vld [vmem:[%s1 + $0x38] sm:$0xf]
      %v277 = vld [vmem:[%s1 + $0x3c] sm:$0xf]
      %v278 = vld [vmem:[%s1 + $0x40] sm:$0xf]
      %v279 = vld [vmem:[%s1 + $0x44] sm:$0xf]
      %v280 = vld [vmem:[%s1 + $0x48] sm:$0xf]
      %v281 = vld [vmem:[%s1 + $0x4c] sm:$0xf]
      %v282 = vld [vmem:[%s1 + $0x50] sm:$0xf]
      %v283 = vld [vmem:[%s1 + $0x54] sm:$0xf]
      %v284 = vld [vmem:[%s1 + $0x58] sm:$0xf]
      %v285 = vld [vmem:[%s1 + $0x5c] sm:$0xf]
      %v286 = vld [vmem:[%s1 + $0x60] sm:$0xf]
      %v287 = vld [vmem:[%s1 + $0x64] sm:$0xf]
      %v288 = vld [vmem:[%s1 + $0x68] sm:$0xf]
      %v289 = vld [vmem:[%s1 + $0x6c] sm:$0xf]
      %v290 = vld [vmem:[%s1 + $0x70] sm:$0xf]
      %v291 = vld [vmem:[%s1 + $0x74] sm:$0xf]
      %v292 = vld [vmem:[%s1 + $0x78] sm:$0xf]
      %v293 = vld [vmem:[%s1 + $0x7c] sm:$0xf]
      %v294 = vld [vmem:[%s1 + $0x80] sm:$0xf]
      %v295 = vld [vmem:[%s1 + $0x84] sm:$0xf]
      %v296 = vld [vmem:[%s1 + $0x88] sm:$0xf]
      %v297 = vld [vmem:[%s1 + $0x8c] sm:$0xf]
      %v298 = vld [vmem:[%s1 + $0x90] sm:$0xf]
      %v299 = vld [vmem:[%s1 + $0x94] sm:$0xf]
      %v300 = vld [vmem:[%s1 + $0x98] sm:$0xf]
      %v301 = vld [vmem:[%s1 + $0x9c] sm:$0xf]
      %v302 = vld [vmem:[%s1 + $0xa0] sm:$0xf]
      %v303 = vld [vmem:[%s1 + $0xa4] sm:$0xf]
      %v304 = vld [vmem:[%s1 + $0xa8] sm:$0xf]
      %v305 = vld [vmem:[%s1 + $0xac] sm:$0xf]
      %v306 = vld [vmem:[%s1 + $0xb0] sm:$0xf]
      %v307 = vld [vmem:[%s1 + $0xb4] sm:$0xf]
      %v308 = vld [vmem:[%s1 + $0xb8] sm:$0xf]
      %v309 = vld [vmem:[%s1 + $0xbc] sm:$0xf]
      %v310 = vld [vmem:[%s1 + $0xc0] sm:$0xf]
      %v311 = vld [vmem:[%s1 + $0xc4] sm:$0xf]
      %v312 = vld [vmem:[%s1 + $0xc8] sm:$0xf]
      %v313 = vld [vmem:[%s1 + $0xcc] sm:$0xf]
      %v314 = vld [vmem:[%s1 + $0xd0] sm:$0xf]
      %v315 = vld [vmem:[%s1 + $0xd4] sm:$0xf]
      %v316 = vld [vmem:[%s1 + $0xd8] sm:$0xf]
      %v317 = vld [vmem:[%s1 + $0xdc] sm:$0xf]
      %v318 = vld [vmem:[%s1 + $0xe0] sm:$0xf]
      %v319 = vld [vmem:[%s1 + $0xe4] sm:$0xf]
      %v320 = vld [vmem:[%s1 + $0xe8] sm:$0xf]
      %v321 = vld [vmem:[%s1 + $0xec] sm:$0xf]
      %v322 = vld [vmem:[%s1 + $0xf0] sm:$0xf]
      %v323 = vld [vmem:[%s1 + $0xf4] sm:$0xf]
      %v324 = vld [vmem:[%s1 + $0xf8] sm:$0xf]
      %v325 = vld [vmem:[%s1 + $0xfc] sm:$0xf]
      %v326 = vld [vmem:[%s1 + $0x100] sm:$0xf]
      %v327 = vld [vmem:[%s1 + $0x104] sm:$0xf]
      %v328 = vld [vmem:[%s1 + $0x108] sm:$0xf]
      %v329 = vld [vmem:[%s1 + $0x10c] sm:$0xf]
      %v330 = vld [vmem:[%s1 + $0x110] sm:$0xf]
      %v331 = vld [vmem:[%s1 + $0x114] sm:$0xf]
      %v332 = vld [vmem:[%s1 + $0x118] sm:$0xf]
      %v333 = vld [vmem:[%s1 + $0x11c] sm:$0xf]
      %v334 = vld [vmem:[%s1 + $0x120] sm:$0xf]
      %v335 = vld [vmem:[%s1 + $0x124] sm:$0xf]
      %v336 = vld [vmem:[%s1 + $0x128] sm:$0xf]
      %v337 = vld [vmem:[%s1 + $0x12c] sm:$0xf]
      %v338 = vld [vmem:[%s1 + $0x130] sm:$0xf]
      %v339 = vld [vmem:[%s1 + $0x134] sm:$0xf]
      %v340 = vld [vmem:[%s1 + $0x138] sm:$0xf]
      %v341 = vld [vmem:[%s1 + $0x13c] sm:$0xf]
      %v342 = vld [vmem:[%s1 + $0x140] sm:$0xf]
      %v343 = vld [vmem:[%s1 + $0x144] sm:$0xf]
      %v344 = vld [vmem:[%s1 + $0x148] sm:$0xf]
      %v345 = vld [vmem:[%s1 + $0x14c] sm:$0xf]
      %v346 = vld [vmem:[%s1 + $0x150] sm:$0xf]
      %v347 = vld [vmem:[%s1 + $0x154] sm:$0xf]
      %v348 = vld [vmem:[%s1 + $0x158] sm:$0xf]
      %v349 = vld [vmem:[%s1 + $0x15c] sm:$0xf]
      %v350 = vld [vmem:[%s1 + $0x160] sm:$0xf]
      %v351 = vld [vmem:[%s1 + $0x164] sm:$0xf]
      %v352 = vld [vmem:[%s1 + $0x168] sm:$0xf]
      %v353 = vld [vmem:[%s1 + $0x16c] sm:$0xf]
      %v354 = vld [vmem:[%s1 + $0x170] sm:$0xf]
      %v355 = vld [vmem:[%s1 + $0x174] sm:$0xf]
      %v356 = vld [vmem:[%s1 + $0x178] sm:$0xf]
      %v357 = vld [vmem:[%s1 + $0x17c] sm:$0xf]
      %v358 = vld [vmem:[%s1 + $0x180] sm:$0xf]
      %v359 = vld [vmem:[%s1 + $0x184] sm:$0xf]
      %v360 = vld [vmem:[%s1 + $0x188] sm:$0xf]
      %v361 = vld [vmem:[%s1 + $0x18c] sm:$0xf]
      %v362 = vld [vmem:[%s1 + $0x190] sm:$0xf]
      %v363 = vld [vmem:[%s1 + $0x194] sm:$0xf]
      %v364 = vld [vmem:[%s1 + $0x198] sm:$0xf]
      %v365 = vld [vmem:[%s1 + $0x19c] sm:$0xf]
      %v366 = vld [vmem:[%s1 + $0x1a0] sm:$0xf]
      %v367 = vld [vmem:[%s1 + $0x1a4] sm:$0xf]
      %v368 = vld [vmem:[%s1 + $0x1a8] sm:$0xf]
      %v369 = vld [vmem:[%s1 + $0x1ac] sm:$0xf]
      %v370 = vld [vmem:[%s1 + $0x1b0] sm:$0xf]
      %v371 = vld [vmem:[%s1 + $0x1b4] sm:$0xf]
      %v372 = vld [vmem:[%s1 + $0x1b8] sm:$0xf]
      %v373 = vld [vmem:[%s1 + $0x1bc] sm:$0xf]
      %v374 = vld [vmem:[%s1 + $0x1c0] sm:$0xf]
      %v375 = vld [vmem:[%s1 + $0x1c4] sm:$0xf]
      %v376 = vld [vmem:[%s1 + $0x1c8] sm:$0xf]
      %v377 = vld [vmem:[%s1 + $0x1cc] sm:$0xf]
      %v378 = vld [vmem:[%s1 + $0x1d0] sm:$0xf]
      %v379 = vld [vmem:[%s1 + $0x1d4] sm:$0xf]
      %v380 = vld [vmem:[%s1 + $0x1d8] sm:$0xf]
      %v381 = vld [vmem:[%s1 + $0x1dc] sm:$0xf]
      %v382 = vld [vmem:[%s1 + $0x1e0] sm:$0xf]
      %v383 = vld [vmem:[%s1 + $0x1e4] sm:$0xf]
      %v384 = vld [vmem:[%s1 + $0x1e8] sm:$0xf]
      %v385 = vld [vmem:[%s1 + $0x1ec] sm:$0xf]
      %v386 = vld [vmem:[%s1 + $0x1f0] sm:$0xf]
      %v387 = vld [vmem:[%s1 + $0x1f4] sm:$0xf]
      %v388 = vld [vmem:[%s1 + $0x1f8] sm:$0xf]
      %v389 = vld [vmem:[%s1 + $0x1fc] sm:$0xf]
      %v390 = vld [vmem:[%s1 + $0x200] sm:$0xf]
      %v391 = vld [vmem:[%s1 + $0x204] sm:$0xf]
      %v392 = vld [vmem:[%s1 + $0x208] sm:$0xf]
      %v393 = vld [vmem:[%s1 + $0x20c] sm:$0xf]
      %v394 = vld [vmem:[%s1 + $0x210] sm:$0xf]
      %v395 = vld [vmem:[%s1 + $0x214] sm:$0xf]
      %v396 = vld [vmem:[%s1 + $0x218] sm:$0xf]
      %v397 = vld [vmem:[%s1 + $0x21c] sm:$0xf]
      %v398 = vld [vmem:[%s1 + $0x220] sm:$0xf]
      %v399 = vld [vmem:[%s1 + $0x224] sm:$0xf]
      %v400 = vld [vmem:[%s1 + $0x228] sm:$0xf]
      %v401 = vld [vmem:[%s1 + $0x22c] sm:$0xf]
      %v402 = vld [vmem:[%s1 + $0x230] sm:$0xf]
      %v403 = vld [vmem:[%s1 + $0x234] sm:$0xf]
      %v404 = vld [vmem:[%s1 + $0x238] sm:$0xf]
      %v405 = vld [vmem:[%s1 + $0x23c] sm:$0xf]
      %v446 = vunpack.c.l.b16 %v222
      %v447 = vunpack.c.h.b16 %v222
      %v448 = vunpack.c.l.b16 %v223
      %v449 = vunpack.c.h.b16 %v223
      %v450 = vunpack.c.l.b16 %v224
      %v451 = vunpack.c.h.b16 %v224
      %v452 = vunpack.c.l.b16 %v225
      %v453 = vunpack.c.h.b16 %v225
      %v454 = vunpack.c.l.b16 %v226
      %v455 = vunpack.c.l.b16 %v227
      %v456 = vunpack.c.h.b16 %v227
      %v457 = vunpack.c.l.b16 %v228
      %v458 = vunpack.c.h.b16 %v228
      %v459 = vunpack.c.l.b16 %v229
      %v460 = vunpack.c.h.b16 %v229
      %v461 = vunpack.c.l.b16 %v230
      %v462 = vunpack.c.h.b16 %v230
      %v463 = vunpack.c.l.b16 %v231
      %v464 = vunpack.c.l.b16 %v232
      %v465 = vunpack.c.h.b16 %v232
      %v466 = vunpack.c.l.b16 %v233
      %v467 = vunpack.c.h.b16 %v233
      %v468 = vunpack.c.l.b16 %v234
      %v469 = vunpack.c.h.b16 %v234
      %v470 = vunpack.c.l.b16 %v235
      %v471 = vunpack.c.h.b16 %v235
      %v472 = vunpack.c.l.b16 %v236
      %v473 = vunpack.c.l.b16 %v237
      %v474 = vunpack.c.h.b16 %v237
      %v475 = vunpack.c.l.b16 %v238
      %v476 = vunpack.c.h.b16 %v238
      %v477 = vunpack.c.l.b16 %v239
      %v478 = vunpack.c.h.b16 %v239
      %v479 = vunpack.c.l.b16 %v240
      %v480 = vunpack.c.h.b16 %v240
      %v481 = vunpack.c.l.b16 %v241
      %v482 = vunpack.c.l.b16 %v242
      %v483 = vunpack.c.h.b16 %v242
      %v484 = vunpack.c.l.b16 %v243
      %v485 = vunpack.c.h.b16 %v243
      %v486 = vunpack.c.l.b16 %v244
      %v487 = vunpack.c.h.b16 %v244
      %v488 = vunpack.c.l.b16 %v245
      %v489 = vunpack.c.h.b16 %v245
      %v490 = vunpack.c.l.b16 %v246
      %v491 = vunpack.c.l.b16 %v247
      %v492 = vunpack.c.h.b16 %v247
      %v493 = vunpack.c.l.b16 %v248
      %v494 = vunpack.c.h.b16 %v248
      %v495 = vunpack.c.l.b16 %v249
      %v496 = vunpack.c.h.b16 %v249
      %v497 = vunpack.c.l.b16 %v250
      %v498 = vunpack.c.h.b16 %v250
      %v499 = vunpack.c.l.b16 %v251
      %v500 = vunpack.c.l.b16 %v252
      %v501 = vunpack.c.h.b16 %v252
      %v502 = vunpack.c.l.b16 %v253
      %v503 = vunpack.c.h.b16 %v253
      %v504 = vunpack.c.l.b16 %v254
      %v505 = vunpack.c.h.b16 %v254
      %v506 = vunpack.c.l.b16 %v255
      %v507 = vunpack.c.h.b16 %v255
      %v508 = vunpack.c.l.b16 %v256
      %v509 = vunpack.c.l.b16 %v257
      %v510 = vunpack.c.h.b16 %v257
      %v511 = vunpack.c.l.b16 %v258
      %v512 = vunpack.c.h.b16 %v258
      %v513 = vunpack.c.l.b16 %v259
      %v514 = vunpack.c.h.b16 %v259
      %v515 = vunpack.c.l.b16 %v260
      %v516 = vunpack.c.h.b16 %v260
      %v517 = vunpack.c.l.b16 %v261
      %v518 = vpack.c.b16 %v455, %v446
      %v519 = vpack.c.b16 %v456, %v447
      %v520 = vpack.c.b16 %v457, %v448
      %v521 = vpack.c.b16 %v458, %v449
      %v522 = vpack.c.b16 %v459, %v450
      %v523 = vpack.c.b16 %v460, %v451
      %v524 = vpack.c.b16 %v461, %v452
      %v525 = vpack.c.b16 %v462, %v453
      %v526 = vpack.c.b16 %v463, %v454
      %v527 = vpack.c.b16 %v473, %v464
      %v528 = vpack.c.b16 %v474, %v465
      %v529 = vpack.c.b16 %v475, %v466
      %v530 = vpack.c.b16 %v476, %v467
      %v531 = vpack.c.b16 %v477, %v468
      %v532 = vpack.c.b16 %v478, %v469
      %v533 = vpack.c.b16 %v479, %v470
      %v534 = vpack.c.b16 %v480, %v471
      %v535 = vpack.c.b16 %v481, %v472
      %v536 = vpack.c.b16 %v491, %v482
      %v537 = vpack.c.b16 %v492, %v483
      %v538 = vpack.c.b16 %v493, %v484
      %v539 = vpack.c.b16 %v494, %v485
      %v540 = vpack.c.b16 %v495, %v486
      %v541 = vpack.c.b16 %v496, %v487
      %v542 = vpack.c.b16 %v497, %v488
      %v543 = vpack.c.b16 %v498, %v489
      %v544 = vpack.c.b16 %v499, %v490
      %v545 = vpack.c.b16 %v509, %v500
      %v546 = vpack.c.b16 %v510, %v501
      %v547 = vpack.c.b16 %v511, %v502
      %v548 = vpack.c.b16 %v512, %v503
      %v549 = vpack.c.b16 %v513, %v504
      %v550 = vpack.c.b16 %v514, %v505
      %v551 = vpack.c.b16 %v515, %v506
      %v552 = vpack.c.b16 %v516, %v507
      %v553 = vpack.c.b16 %v517, %v508
      %v734 = vunpack.c.l.b16 %v262
      %v735 = vunpack.c.l.b16 %v263
      %v736 = vunpack.c.l.b16 %v264
      %v737 = vunpack.c.l.b16 %v265
      %v738 = vunpack.c.l.b16 %v266
      %v739 = vunpack.c.l.b16 %v267
      %v740 = vunpack.c.l.b16 %v268
      %v741 = vunpack.c.l.b16 %v269
      %v742 = vunpack.c.l.b16 %v270
      %v743 = vunpack.c.l.b16 %v271
      %v744 = vunpack.c.l.b16 %v272
      %v745 = vunpack.c.l.b16 %v273
      %v746 = vunpack.c.l.b16 %v274
      %v747 = vunpack.c.l.b16 %v275
      %v748 = vunpack.c.l.b16 %v276
      %v749 = vunpack.c.l.b16 %v277
      %v750 = vunpack.c.l.b16 %v278
      %v751 = vunpack.c.l.b16 %v279
      %v752 = vunpack.c.l.b16 %v280
      %v753 = vunpack.c.l.b16 %v281
      %v754 = vunpack.c.l.b16 %v282
      %v755 = vunpack.c.l.b16 %v283
      %v756 = vunpack.c.l.b16 %v284
      %v757 = vunpack.c.l.b16 %v285
      %v758 = vunpack.c.l.b16 %v286
      %v759 = vunpack.c.l.b16 %v287
      %v760 = vunpack.c.l.b16 %v288
      %v761 = vunpack.c.l.b16 %v289
      %v762 = vunpack.c.l.b16 %v290
      %v763 = vunpack.c.l.b16 %v291
      %v764 = vunpack.c.l.b16 %v292
      %v765 = vunpack.c.l.b16 %v293
      %v766 = vunpack.c.l.b16 %v294
      %v767 = vunpack.c.l.b16 %v295
      %v768 = vunpack.c.l.b16 %v296
      %v769 = vunpack.c.l.b16 %v297
      %v770 = vunpack.c.l.b16 %v298
      %v771 = vunpack.c.l.b16 %v299
      %v772 = vunpack.c.l.b16 %v300
      %v773 = vunpack.c.l.b16 %v301
      %v774 = vunpack.c.l.b16 %v302
      %v775 = vunpack.c.l.b16 %v303
      %v776 = vunpack.c.l.b16 %v304
      %v777 = vunpack.c.l.b16 %v305
      %v778 = vunpack.c.l.b16 %v306
      %v779 = vunpack.c.l.b16 %v307
      %v780 = vunpack.c.l.b16 %v308
      %v781 = vunpack.c.l.b16 %v309
      %v782 = vunpack.c.l.b16 %v310
      %v783 = vunpack.c.l.b16 %v311
      %v784 = vunpack.c.l.b16 %v312
      %v785 = vunpack.c.l.b16 %v313
      %v786 = vunpack.c.l.b16 %v314
      %v787 = vunpack.c.l.b16 %v315
      %v788 = vunpack.c.l.b16 %v316
      %v789 = vunpack.c.l.b16 %v317
      %v790 = vunpack.c.l.b16 %v318
      %v791 = vunpack.c.l.b16 %v319
      %v792 = vunpack.c.l.b16 %v320
      %v793 = vunpack.c.l.b16 %v321
      %v794 = vunpack.c.l.b16 %v322
      %v795 = vunpack.c.l.b16 %v323
      %v796 = vunpack.c.l.b16 %v324
      %v797 = vunpack.c.l.b16 %v325
      %v798 = vunpack.c.l.b16 %v326
      %v799 = vunpack.c.l.b16 %v327
      %v800 = vunpack.c.l.b16 %v328
      %v801 = vunpack.c.l.b16 %v329
      %v802 = vunpack.c.l.b16 %v330
      %v803 = vunpack.c.l.b16 %v331
      %v804 = vunpack.c.l.b16 %v332
      %v805 = vunpack.c.l.b16 %v333
      %v806 = vunpack.c.l.b16 %v334
      %v807 = vunpack.c.l.b16 %v335
      %v808 = vunpack.c.l.b16 %v336
      %v809 = vunpack.c.l.b16 %v337
      %v810 = vunpack.c.l.b16 %v338
      %v811 = vunpack.c.l.b16 %v339
      %v812 = vunpack.c.l.b16 %v340
      %v813 = vunpack.c.l.b16 %v341
      %v814 = vunpack.c.l.b16 %v342
      %v815 = vunpack.c.l.b16 %v343
      %v816 = vunpack.c.l.b16 %v344
      %v817 = vunpack.c.l.b16 %v345
      %v818 = vunpack.c.l.b16 %v346
      %v819 = vunpack.c.l.b16 %v347
      %v820 = vunpack.c.l.b16 %v348
      %v821 = vunpack.c.l.b16 %v349
      %v822 = vunpack.c.l.b16 %v350
      %v823 = vunpack.c.l.b16 %v351
      %v824 = vunpack.c.l.b16 %v352
      %v825 = vunpack.c.l.b16 %v353
      %v826 = vunpack.c.l.b16 %v354
      %v827 = vunpack.c.l.b16 %v355
      %v828 = vunpack.c.l.b16 %v356
      %v829 = vunpack.c.l.b16 %v357
      %v830 = vunpack.c.l.b16 %v358
      %v831 = vunpack.c.l.b16 %v359
      %v832 = vunpack.c.l.b16 %v360
      %v833 = vunpack.c.l.b16 %v361
      %v834 = vunpack.c.l.b16 %v362
      %v835 = vunpack.c.l.b16 %v363
      %v836 = vunpack.c.l.b16 %v364
      %v837 = vunpack.c.l.b16 %v365
      %v838 = vunpack.c.l.b16 %v366
      %v839 = vunpack.c.l.b16 %v367
      %v840 = vunpack.c.l.b16 %v368
      %v841 = vunpack.c.l.b16 %v369
      %v842 = vunpack.c.l.b16 %v370
      %v843 = vunpack.c.l.b16 %v371
      %v844 = vunpack.c.l.b16 %v372
      %v845 = vunpack.c.l.b16 %v373
      %v846 = vunpack.c.l.b16 %v374
      %v847 = vunpack.c.l.b16 %v375
      %v848 = vunpack.c.l.b16 %v376
      %v849 = vunpack.c.l.b16 %v377
      %v850 = vunpack.c.l.b16 %v378
      %v851 = vunpack.c.l.b16 %v379
      %v852 = vunpack.c.l.b16 %v380
      %v853 = vunpack.c.l.b16 %v381
      %v854 = vunpack.c.l.b16 %v382
      %v855 = vunpack.c.l.b16 %v383
      %v856 = vunpack.c.l.b16 %v384
      %v857 = vunpack.c.l.b16 %v385
      %v858 = vunpack.c.l.b16 %v386
      %v859 = vunpack.c.l.b16 %v387
      %v860 = vunpack.c.l.b16 %v388
      %v861 = vunpack.c.l.b16 %v389
      %v862 = vunpack.c.l.b16 %v390
      %v863 = vunpack.c.l.b16 %v391
      %v864 = vunpack.c.l.b16 %v392
      %v865 = vunpack.c.l.b16 %v393
      %v866 = vunpack.c.l.b16 %v394
      %v867 = vunpack.c.l.b16 %v395
      %v868 = vunpack.c.l.b16 %v396
      %v869 = vunpack.c.l.b16 %v397
      %v870 = vunpack.c.l.b16 %v398
      %v871 = vunpack.c.l.b16 %v399
      %v872 = vunpack.c.l.b16 %v400
      %v873 = vunpack.c.l.b16 %v401
      %v874 = vunpack.c.l.b16 %v402
      %v875 = vunpack.c.l.b16 %v403
      %v876 = vunpack.c.l.b16 %v404
      %v877 = vunpack.c.l.b16 %v405
      %v878 = vpack.c.b16 %v735, %v734
      %v879 = vpack.c.b16 %v737, %v736
      %v880 = vpack.c.b16 %v739, %v738
      %v881 = vpack.c.b16 %v741, %v740
      %v882 = vpack.c.b16 %v743, %v742
      %v883 = vpack.c.b16 %v745, %v744
      %v884 = vpack.c.b16 %v747, %v746
      %v885 = vpack.c.b16 %v749, %v748
      %v886 = vpack.c.b16 %v751, %v750
      %v887 = vpack.c.b16 %v753, %v752
      %v888 = vpack.c.b16 %v755, %v754
      %v889 = vpack.c.b16 %v757, %v756
      %v890 = vpack.c.b16 %v759, %v758
      %v891 = vpack.c.b16 %v761, %v760
      %v892 = vpack.c.b16 %v763, %v762
      %v893 = vpack.c.b16 %v765, %v764
      %v894 = vpack.c.b16 %v767, %v766
      %v895 = vpack.c.b16 %v769, %v768
      %v896 = vpack.c.b16 %v771, %v770
      %v897 = vpack.c.b16 %v773, %v772
      %v898 = vpack.c.b16 %v775, %v774
      %v899 = vpack.c.b16 %v777, %v776
      %v900 = vpack.c.b16 %v779, %v778
      %v901 = vpack.c.b16 %v781, %v780
      %v902 = vpack.c.b16 %v783, %v782
      %v903 = vpack.c.b16 %v785, %v784
      %v904 = vpack.c.b16 %v787, %v786
      %v905 = vpack.c.b16 %v789, %v788
      %v906 = vpack.c.b16 %v791, %v790
      %v907 = vpack.c.b16 %v793, %v792
      %v908 = vpack.c.b16 %v795, %v794
      %v909 = vpack.c.b16 %v797, %v796
      %v910 = vpack.c.b16 %v799, %v798
      %v911 = vpack.c.b16 %v801, %v800
      %v912 = vpack.c.b16 %v803, %v802
      %v913 = vpack.c.b16 %v805, %v804
      %v914 = vpack.c.b16 %v807, %v806
      %v915 = vpack.c.b16 %v809, %v808
      %v916 = vpack.c.b16 %v811, %v810
      %v917 = vpack.c.b16 %v813, %v812
      %v918 = vpack.c.b16 %v815, %v814
      %v919 = vpack.c.b16 %v817, %v816
      %v920 = vpack.c.b16 %v819, %v818
      %v921 = vpack.c.b16 %v821, %v820
      %v922 = vpack.c.b16 %v823, %v822
      %v923 = vpack.c.b16 %v825, %v824
      %v924 = vpack.c.b16 %v827, %v826
      %v925 = vpack.c.b16 %v829, %v828
      %v926 = vpack.c.b16 %v831, %v830
      %v927 = vpack.c.b16 %v833, %v832
      %v928 = vpack.c.b16 %v835, %v834
      %v929 = vpack.c.b16 %v837, %v836
      %v930 = vpack.c.b16 %v839, %v838
      %v931 = vpack.c.b16 %v841, %v840
      %v932 = vpack.c.b16 %v843, %v842
      %v933 = vpack.c.b16 %v845, %v844
      %v934 = vpack.c.b16 %v847, %v846
      %v935 = vpack.c.b16 %v849, %v848
      %v936 = vpack.c.b16 %v851, %v850
      %v937 = vpack.c.b16 %v853, %v852
      %v938 = vpack.c.b16 %v855, %v854
      %v939 = vpack.c.b16 %v857, %v856
      %v940 = vpack.c.b16 %v859, %v858
      %v941 = vpack.c.b16 %v861, %v860
      %v942 = vpack.c.b16 %v863, %v862
      %v943 = vpack.c.b16 %v865, %v864
      %v944 = vpack.c.b16 %v867, %v866
      %v945 = vpack.c.b16 %v869, %v868
      %v946 = vpack.c.b16 %v871, %v870
      %v947 = vpack.c.b16 %v873, %v872
      %v948 = vpack.c.b16 %v875, %v874
      %v949 = vpack.c.b16 %v877, %v876
      %1022 = vmatprep.subr.bf16.mxu0 0
      %1023 = vmatpush1.bf16.msra.mxu0 %v885
      %1024 = vmatprep.subr.bf16.mxu0 0
      %1025 = vmatpush1.bf16.msra.mxu0 %v884
      %1026 = vmatprep.subr.bf16.mxu0 0
      %1027 = vmatpush1.bf16.msra.mxu0 %v883
      %1028 = vmatprep.subr.bf16.mxu0 0
      %1029 = vmatpush1.bf16.msra.mxu0 %v882
      %1030 = vmatprep.subr.bf16.mxu0 0
      %1031 = vmatpush1.bf16.msra.mxu0 %v881
      %1032 = vmatprep.subr.bf16.mxu0 0
      %1033 = vmatpush1.bf16.msra.mxu0 %v880
      %1034 = vmatprep.subr.bf16.mxu0 0
      %1035 = vmatpush1.bf16.msra.mxu0 %v879
      %1036 = vmatprep.subr.bf16.mxu0 0
      %1037 = vmatpush1.bf16.msra.mxu0 %v878
      %1038 = vmatprep.subr.bf16.mxu0 0
      %1039 = vmatpush2.bf16.msra.mxu0 %v893
      %1040 = vmatprep.subr.bf16.mxu0 0
      %1041 = vmatpush2.bf16.msra.mxu0 %v892
      %1042 = vmatprep.subr.bf16.mxu0 0
      %1043 = vmatpush2.bf16.msra.mxu0 %v891
      %1044 = vmatprep.subr.bf16.mxu0 0
      %1045 = vmatpush2.bf16.msra.mxu0 %v890
      %1046 = vmatprep.subr.bf16.mxu0 0
      %1047 = vmatpush2.bf16.msra.mxu0 %v889
      %1048 = vmatprep.subr.bf16.mxu0 0
      %1049 = vmatpush2.bf16.msra.mxu0 %v888
      %1050 = vmatprep.subr.bf16.mxu0 0
      %1051 = vmatpush2.bf16.msra.mxu0 %v887
      %1052 = vmatprep.subr.bf16.mxu0 0
      %1053 = vmatpush2.bf16.msra.mxu0 %v886
      %1054 = vmatprep.mubr.bf16.mxu0 %v519
      %1055 = vmatmul.mubr.bf16.gmra.mxu0 %v518
      %v1056 = vpop.f32.mrf.mxu0
      %v1057 = vadd.f32 0.0, %v1056
      %v1058 = vpop.f32.mrf.mxu0
      %v1059 = vpop.f32.mrf.mxu0
      %v1060 = vadd.f32 0.0, %v1059
      %v1061 = vpop.f32.mrf.mxu0
      %1062 = vmatprep.mubr.bf16.mxu0 %v528
      %1063 = vmatmul.mubr.bf16.gmra.mxu0 %v527
      %v1064 = vpop.f32.mrf.mxu0
      %v1065 = vadd.f32 0.0, %v1064
      %v1066 = vpop.f32.mrf.mxu0
      %v1067 = vpop.f32.mrf.mxu0
      %v1068 = vadd.f32 0.0, %v1067
      %v1069 = vpop.f32.mrf.mxu0
      %1070 = vmatprep.mubr.bf16.mxu0 %v537
      %1071 = vmatmul.mubr.bf16.gmra.mxu0 %v536
      %v1072 = vpop.f32.mrf.mxu0
      %v1073 = vadd.f32 0.0, %v1072
      %v1074 = vpop.f32.mrf.mxu0
      %v1075 = vpop.f32.mrf.mxu0
      %v1076 = vadd.f32 0.0, %v1075
      %v1077 = vpop.f32.mrf.mxu0
      %1078 = vmatprep.mubr.bf16.mxu0 %v546
      %1079 = vmatmul.mubr.bf16.gmra.mxu0 %v545
      %v1080 = vpop.f32.mrf.mxu0
      %v1081 = vadd.f32 0.0, %v1080
      %v1082 = vpop.f32.mrf.mxu0
      %v1083 = vpop.f32.mrf.mxu0
      %v1084 = vadd.f32 0.0, %v1083
      %v1085 = vpop.f32.mrf.mxu0
      %1086 = vdwg.mxu0
      %1087 = vmatprep.subr.bf16.mxu0 0
      %1088 = vmatpush1.bf16.msra.mxu0 %v901
      %1089 = vmatprep.subr.bf16.mxu0 0
      %1090 = vmatpush1.bf16.msra.mxu0 %v900
      %1091 = vmatprep.subr.bf16.mxu0 0
      %1092 = vmatpush1.bf16.msra.mxu0 %v899
      %1093 = vmatprep.subr.bf16.mxu0 0
      %1094 = vmatpush1.bf16.msra.mxu0 %v898
      %1095 = vmatprep.subr.bf16.mxu0 0
      %1096 = vmatpush1.bf16.msra.mxu0 %v897
      %1097 = vmatprep.subr.bf16.mxu0 0
      %1098 = vmatpush1.bf16.msra.mxu0 %v896
      %1099 = vmatprep.subr.bf16.mxu0 0
      %1100 = vmatpush1.bf16.msra.mxu0 %v895
      %1101 = vmatprep.subr.bf16.mxu0 0
      %1102 = vmatpush1.bf16.msra.mxu0 %v894
      %1103 = vmatprep.subr.bf16.mxu0 0
      %1104 = vmatpush2.bf16.msra.mxu0 %v909
      %1105 = vmatprep.subr.bf16.mxu0 0
      %1106 = vmatpush2.bf16.msra.mxu0 %v908
      %1107 = vmatprep.subr.bf16.mxu0 0
      %1108 = vmatpush2.bf16.msra.mxu0 %v907
      %1109 = vmatprep.subr.bf16.mxu0 0
      %1110 = vmatpush2.bf16.msra.mxu0 %v906
      %1111 = vmatprep.subr.bf16.mxu0 0
      %1112 = vmatpush2.bf16.msra.mxu0 %v905
      %1113 = vmatprep.subr.bf16.mxu0 0
      %1114 = vmatpush2.bf16.msra.mxu0 %v904
      %1115 = vmatprep.subr.bf16.mxu0 0
      %1116 = vmatpush2.bf16.msra.mxu0 %v903
      %1117 = vmatprep.subr.bf16.mxu0 0
      %1118 = vmatpush2.bf16.msra.mxu0 %v902
      %1119 = vmatprep.mubr.bf16.mxu0 %v521
      %1120 = vmatmul.mubr.bf16.gmra.mxu0 %v520
      %v1121 = vpop.f32.mrf.mxu0
      %v1122 = vadd.f32 %v1057, %v1121
      %v1123 = vpop.f32.mrf.mxu0
      %v1124 = vpop.f32.mrf.mxu0
      %v1125 = vadd.f32 %v1060, %v1124
      %v1126 = vpop.f32.mrf.mxu0
      %1127 = vmatprep.mubr.bf16.mxu0 %v530
      %1128 = vmatmul.mubr.bf16.gmra.mxu0 %v529
      %v1129 = vpop.f32.mrf.mxu0
      %v1130 = vadd.f32 %v1065, %v1129
      %v1131 = vpop.f32.mrf.mxu0
      %v1132 = vpop.f32.mrf.mxu0
      %v1133 = vadd.f32 %v1068, %v1132
      %v1134 = vpop.f32.mrf.mxu0
      %1135 = vmatprep.mubr.bf16.mxu0 %v539
      %1136 = vmatmul.mubr.bf16.gmra.mxu0 %v538
      %v1137 = vpop.f32.mrf.mxu0
      %v1138 = vadd.f32 %v1073, %v1137
      %v1139 = vpop.f32.mrf.mxu0
      %v1140 = vpop.f32.mrf.mxu0
      %v1141 = vadd.f32 %v1076, %v1140
      %v1142 = vpop.f32.mrf.mxu0
      %1143 = vmatprep.mubr.bf16.mxu0 %v548
      %1144 = vmatmul.mubr.bf16.gmra.mxu0 %v547
      %v1145 = vpop.f32.mrf.mxu0
      %v1146 = vadd.f32 %v1081, %v1145
      %v1147 = vpop.f32.mrf.mxu0
      %v1148 = vpop.f32.mrf.mxu0
      %v1149 = vadd.f32 %v1084, %v1148
      %v1150 = vpop.f32.mrf.mxu0
      %1151 = vdwg.mxu0
      %1152 = vmatprep.subr.bf16.mxu0 0
      %1153 = vmatpush1.bf16.msra.mxu0 %v917
      %1154 = vmatprep.subr.bf16.mxu0 0
      %1155 = vmatpush1.bf16.msra.mxu0 %v916
      %1156 = vmatprep.subr.bf16.mxu0 0
      %1157 = vmatpush1.bf16.msra.mxu0 %v915
      %1158 = vmatprep.subr.bf16.mxu0 0
      %1159 = vmatpush1.bf16.msra.mxu0 %v914
      %1160 = vmatprep.subr.bf16.mxu0 0
      %1161 = vmatpush1.bf16.msra.mxu0 %v913
      %1162 = vmatprep.subr.bf16.mxu0 0
      %1163 = vmatpush1.bf16.msra.mxu0 %v912
      %1164 = vmatprep.subr.bf16.mxu0 0
      %1165 = vmatpush1.bf16.msra.mxu0 %v911
      %1166 = vmatprep.subr.bf16.mxu0 0
      %1167 = vmatpush1.bf16.msra.mxu0 %v910
      %1168 = vmatprep.subr.bf16.mxu0 0
      %1169 = vmatpush2.bf16.msra.mxu0 %v925
      %1170 = vmatprep.subr.bf16.mxu0 0
      %1171 = vmatpush2.bf16.msra.mxu0 %v924
      %1172 = vmatprep.subr.bf16.mxu0 0
      %1173 = vmatpush2.bf16.msra.mxu0 %v923
      %1174 = vmatprep.subr.bf16.mxu0 0
      %1175 = vmatpush2.bf16.msra.mxu0 %v922
      %1176 = vmatprep.subr.bf16.mxu0 0
      %1177 = vmatpush2.bf16.msra.mxu0 %v921
      %1178 = vmatprep.subr.bf16.mxu0 0
      %1179 = vmatpush2.bf16.msra.mxu0 %v920
      %1180 = vmatprep.subr.bf16.mxu0 0
      %1181 = vmatpush2.bf16.msra.mxu0 %v919
      %1182 = vmatprep.subr.bf16.mxu0 0
      %1183 = vmatpush2.bf16.msra.mxu0 %v918
      %1184 = vmatprep.mubr.bf16.mxu0 %v523
      %1185 = vmatmul.mubr.bf16.gmra.mxu0 %v522
      %v1186 = vpop.f32.mrf.mxu0
      %v1187 = vadd.f32 %v1122, %v1186
      %v1188 = vpop.f32.mrf.mxu0
      %v1189 = vpop.f32.mrf.mxu0
      %v1190 = vadd.f32 %v1125, %v1189
      %v1191 = vpop.f32.mrf.mxu0
      %1192 = vmatprep.mubr.bf16.mxu0 %v532
      %1193 = vmatmul.mubr.bf16.gmra.mxu0 %v531
      %v1194 = vpop.f32.mrf.mxu0
      %v1195 = vadd.f32 %v1130, %v1194
      %v1196 = vpop.f32.mrf.mxu0
      %v1197 = vpop.f32.mrf.mxu0
      %v1198 = vadd.f32 %v1133, %v1197
      %v1199 = vpop.f32.mrf.mxu0
      %1200 = vmatprep.mubr.bf16.mxu0 %v541
      %1201 = vmatmul.mubr.bf16.gmra.mxu0 %v540
      %v1202 = vpop.f32.mrf.mxu0
      %v1203 = vadd.f32 %v1138, %v1202
      %v1204 = vpop.f32.mrf.mxu0
      %v1205 = vpop.f32.mrf.mxu0
      %v1206 = vadd.f32 %v1141, %v1205
      %v1207 = vpop.f32.mrf.mxu0
      %1208 = vmatprep.mubr.bf16.mxu0 %v550
      %1209 = vmatmul.mubr.bf16.gmra.mxu0 %v549
      %v1210 = vpop.f32.mrf.mxu0
      %v1211 = vadd.f32 %v1146, %v1210
      %v1212 = vpop.f32.mrf.mxu0
      %v1213 = vpop.f32.mrf.mxu0
      %v1214 = vadd.f32 %v1149, %v1213
      %v1215 = vpop.f32.mrf.mxu0
      %1216 = vdwg.mxu0
      %1217 = vmatprep.subr.bf16.mxu0 0
      %1218 = vmatpush1.bf16.msra.mxu0 %v933
      %1219 = vmatprep.subr.bf16.mxu0 0
      %1220 = vmatpush1.bf16.msra.mxu0 %v932
      %1221 = vmatprep.subr.bf16.mxu0 0
      %1222 = vmatpush1.bf16.msra.mxu0 %v931
      %1223 = vmatprep.subr.bf16.mxu0 0
      %1224 = vmatpush1.bf16.msra.mxu0 %v930
      %1225 = vmatprep.subr.bf16.mxu0 0
      %1226 = vmatpush1.bf16.msra.mxu0 %v929
      %1227 = vmatprep.subr.bf16.mxu0 0
      %1228 = vmatpush1.bf16.msra.mxu0 %v928
      %1229 = vmatprep.subr.bf16.mxu0 0
      %1230 = vmatpush1.bf16.msra.mxu0 %v927
      %1231 = vmatprep.subr.bf16.mxu0 0
      %1232 = vmatpush1.bf16.msra.mxu0 %v926
      %1233 = vmatprep.subr.bf16.mxu0 0
      %1234 = vmatpush2.bf16.msra.mxu0 %v941
      %1235 = vmatprep.subr.bf16.mxu0 0
      %1236 = vmatpush2.bf16.msra.mxu0 %v940
      %1237 = vmatprep.subr.bf16.mxu0 0
      %1238 = vmatpush2.bf16.msra.mxu0 %v939
      %1239 = vmatprep.subr.bf16.mxu0 0
      %1240 = vmatpush2.bf16.msra.mxu0 %v938
      %1241 = vmatprep.subr.bf16.mxu0 0
      %1242 = vmatpush2.bf16.msra.mxu0 %v937
      %1243 = vmatprep.subr.bf16.mxu0 0
      %1244 = vmatpush2.bf16.msra.mxu0 %v936
      %1245 = vmatprep.subr.bf16.mxu0 0
      %1246 = vmatpush2.bf16.msra.mxu0 %v935
      %1247 = vmatprep.subr.bf16.mxu0 0
      %1248 = vmatpush2.bf16.msra.mxu0 %v934
      %1249 = vmatprep.mubr.bf16.mxu0 %v525
      %1250 = vmatmul.mubr.bf16.gmra.mxu0 %v524
      %v1251 = vpop.f32.mrf.mxu0
      %v1252 = vadd.f32 %v1187, %v1251
      %v1253 = vpop.f32.mrf.mxu0
      %v1254 = vpop.f32.mrf.mxu0
      %v1255 = vadd.f32 %v1190, %v1254
      %v1256 = vpop.f32.mrf.mxu0
      %1257 = vmatprep.mubr.bf16.mxu0 %v534
      %1258 = vmatmul.mubr.bf16.gmra.mxu0 %v533
      %v1259 = vpop.f32.mrf.mxu0
      %v1260 = vadd.f32 %v1195, %v1259
      %v1261 = vpop.f32.mrf.mxu0
      %v1262 = vpop.f32.mrf.mxu0
      %v1263 = vadd.f32 %v1198, %v1262
      %v1264 = vpop.f32.mrf.mxu0
      %1265 = vmatprep.mubr.bf16.mxu0 %v543
      %1266 = vmatmul.mubr.bf16.gmra.mxu0 %v542
      %v1267 = vpop.f32.mrf.mxu0
      %v1268 = vadd.f32 %v1203, %v1267
      %v1269 = vpop.f32.mrf.mxu0
      %v1270 = vpop.f32.mrf.mxu0
      %v1271 = vadd.f32 %v1206, %v1270
      %v1272 = vpop.f32.mrf.mxu0
      %1273 = vmatprep.mubr.bf16.mxu0 %v552
      %1274 = vmatmul.mubr.bf16.gmra.mxu0 %v551
      %v1275 = vpop.f32.mrf.mxu0
      %v1276 = vadd.f32 %v1211, %v1275
      %v1277 = vpop.f32.mrf.mxu0
      %v1278 = vpop.f32.mrf.mxu0
      %v1279 = vadd.f32 %v1214, %v1278
      %v1280 = vpop.f32.mrf.mxu0
      %1281 = vdwg.mxu0
      %1282 = vmatprep.subr.bf16.mxu0 0
      %1283 = vmatpush1.bf16.msra.mxu0 %v949
      %1284 = vmatprep.subr.bf16.mxu0 0
      %1285 = vmatpush1.bf16.msra.mxu0 %v948
      %1286 = vmatprep.subr.bf16.mxu0 0
      %1287 = vmatpush1.bf16.msra.mxu0 %v947
      %1288 = vmatprep.subr.bf16.mxu0 0
      %1289 = vmatpush1.bf16.msra.mxu0 %v946
      %1290 = vmatprep.subr.bf16.mxu0 0
      %1291 = vmatpush1.bf16.msra.mxu0 %v945
      %1292 = vmatprep.subr.bf16.mxu0 0
      %1293 = vmatpush1.bf16.msra.mxu0 %v944
      %1294 = vmatprep.subr.bf16.mxu0 0
      %1295 = vmatpush1.bf16.msra.mxu0 %v943
      %1296 = vmatprep.subr.bf16.mxu0 0
      %1297 = vmatpush1.bf16.msra.mxu0 %v942
      %1298 = vmatprep.subr.bf16.mxu0 0
      %1299 = vmatpush2.bf16.msra.mxu0 0
      %1300 = vmatprep.subr.bf16.mxu0 0
      %1301 = vmatpush2.bf16.msra.mxu0 0
      %1302 = vmatprep.subr.bf16.mxu0 0
      %1303 = vmatpush2.bf16.msra.mxu0 0
      %1304 = vmatprep.subr.bf16.mxu0 0
      %1305 = vmatpush2.bf16.msra.mxu0 0
      %1306 = vmatprep.subr.bf16.mxu0 0
      %1307 = vmatpush2.bf16.msra.mxu0 0
      %1308 = vmatprep.subr.bf16.mxu0 0
      %1309 = vmatpush2.bf16.msra.mxu0 0
      %1310 = vmatprep.subr.bf16.mxu0 0
      %1311 = vmatpush2.bf16.msra.mxu0 0
      %1312 = vmatprep.subr.bf16.mxu0 0
      %1313 = vmatpush2.bf16.msra.mxu0 0
      %1314 = vmatprep.mubr.bf16.mxu0 0
      %1315 = vmatmul.mubr.bf16.gmra.mxu0 %v526
      %v1316 = vpop.f32.mrf.mxu0
      %v1317 = vadd.f32 %v1252, %v1316
      %v1318 = vpop.f32.mrf.mxu0
      %v1319 = vpop.f32.mrf.mxu0
      %v1320 = vadd.f32 %v1255, %v1319
      %v1321 = vpop.f32.mrf.mxu0
      %1322 = vmatprep.mubr.bf16.mxu0 0
      %1323 = vmatmul.mubr.bf16.gmra.mxu0 %v535
      %v1324 = vpop.f32.mrf.mxu0
      %v1325 = vadd.f32 %v1260, %v1324
      %v1326 = vpop.f32.mrf.mxu0
      %v1327 = vpop.f32.mrf.mxu0
      %v1328 = vadd.f32 %v1263, %v1327
      %v1329 = vpop.f32.mrf.mxu0
      %1330 = vmatprep.mubr.bf16.mxu0 0
      %1331 = vmatmul.mubr.bf16.gmra.mxu0 %v544
      %v1332 = vpop.f32.mrf.mxu0
      %v1333 = vadd.f32 %v1268, %v1332
      %v1334 = vpop.f32.mrf.mxu0
      %v1335 = vpop.f32.mrf.mxu0
      %v1336 = vadd.f32 %v1271, %v1335
      %v1337 = vpop.f32.mrf.mxu0
      %1338 = vmatprep.mubr.bf16.mxu0 0
      %1339 = vmatmul.mubr.bf16.gmra.mxu0 %v553
      %v1340 = vpop.f32.mrf.mxu0
      %v1341 = vadd.f32 %v1276, %v1340
      %v1342 = vpop.f32.mrf.mxu0
      %v1343 = vpop.f32.mrf.mxu0
      %v1344 = vadd.f32 %v1279, %v1343
      %v1345 = vpop.f32.mrf.mxu0
      %1346 = vdwg.mxu0
      %1347 = vst [vmem:[%s213] sm:$0xff] %v1317
      %1348 = vst [vmem:[%s213 + $0x8] sm:$0xff] %v1320
      %1349 = vst [vmem:[%s213 + $0x10] sm:$0xff] %v1325
      %1350 = vst [vmem:[%s213 + $0x18] sm:$0xff] %v1328
      %1351 = vst [vmem:[%s213 + $0x20] sm:$0xff] %v1333
      %1352 = vst [vmem:[%s213 + $0x28] sm:$0xff] %v1336
      %1353 = vst [vmem:[%s213 + $0x30] sm:$0xff] %v1341
      %1354 = vst [vmem:[%s213 + $0x38] sm:$0xff] %v1344
      %v1355 = vadd.f32 %v1317, %v1320
      %v1356 = vadd.f32 %v1355, %v1325
      %v1357 = vadd.f32 %v1356, %v1328
      %v1358 = vadd.f32 %v1357, %v1333
      %v1359 = vadd.f32 %v1358, %v1336
      %v1360 = vadd.f32 %v1359, %v1341
      %v1361 = vadd.f32 %v1360, %v1344
      %v1362 = vrot.slane %v1361, 4
      %v1363 = vadd.f32 %v1361, %v1362
      %v1364 = vrot.slane %v1363, 2
      %v1365 = vadd.f32 %v1363, %v1364
      %v1366 = vrot.slane %v1365, 1
      %v1367 = vadd.f32 %v1365, %v1366
      %1368 = vst [vmem:[%s217] sm:$0x1] %v1367
      %v1369 = vmul.f32 %v1317, %v1317
      %v1370 = vmul.f32 %v1320, %v1320
      %v1371 = vmul.f32 %v1325, %v1325
      %v1372 = vmul.f32 %v1328, %v1328
      %v1373 = vmul.f32 %v1333, %v1333
      %v1374 = vmul.f32 %v1336, %v1336
      %v1375 = vmul.f32 %v1341, %v1341
      %v1376 = vmul.f32 %v1344, %v1344
      %v1377 = vadd.f32 %v1369, %v1370
      %v1378 = vadd.f32 %v1377, %v1371
      %v1379 = vadd.f32 %v1378, %v1372
      %v1380 = vadd.f32 %v1379, %v1373
      %v1381 = vadd.f32 %v1380, %v1374
      %v1382 = vadd.f32 %v1381, %v1375
      %v1383 = vadd.f32 %v1382, %v1376
      %v1384 = vrot.slane %v1383, 4
      %v1385 = vadd.f32 %v1383, %v1384
      %v1386 = vrot.slane %v1385, 2
      %v1387 = vadd.f32 %v1385, %v1386
      %v1388 = vrot.slane %v1387, 1
      %v1389 = vadd.f32 %v1387, %v1388
      %1390 = vst [vmem:[%s220] sm:$0x1] %v1389
      %s1391 = smul.u32 8, %s16
      %p1392 = scmp.lt.s32.totalorder %s1391, 15
      %s1393 = scalar_select %p1392, %s1391, 15
      %s1394 = smul.addr %s1393, 8
      %s1395 = scalar_lea.vmem %s2, %s1394
      %p1396 = scmp.lt.s32.totalorder %s16, 1
      %s1397 = scalar_select %p1396, %s16, 1
      %s1398 = scalar_lea.vmem %s3, %s1397
      %p1399 = scmp.lt.s32.totalorder %s16, 1
      %s1400 = scalar_select %p1399, %s16, 1
      %s1401 = scalar_lea.vmem %s4, %s1400
      // Predicated region
      $region29: #{down_forward.6} parent=27 // pred_check
        %p1402 = pneg %p81
      $region30: #{down_forward.6} parent=27 // pred_check_branch
        %1404 = sbr.rel (%p1402) target = $region32
      $region31: #{down_forward.6} parent=27 // pred_region
        %s1405 = smul.u32 8, %s16
      $region32: #{down_forward.6} parent=27 // pred_fallthru
        _
      // Predicated region
      $region33: #{down_forward.6} parent=27 // pred_check
        %p1406 = pneg %p107
      $region34: #{down_forward.6} parent=27 // pred_check_branch
        %1408 = sbr.rel (%p1406) target = $region36
      $region35: #{down_forward.6} parent=27 // pred_region
        _
      $region36: #{down_forward.6} parent=27 // pred_fallthru
        _
      // Predicated region
      $region37: #{down_forward.6} parent=27 // pred_check
        %p1409 = pneg %p133
      $region38: #{down_forward.6} parent=27 // pred_check_branch
        %1411 = sbr.rel (%p1409) target = $region40
      $region39: #{down_forward.6} parent=27 // pred_region
        _
      $region40: #{down_forward.6} parent=27 // pred_fallthru
        _
    $region28: #{down_forward.6} parent=5 // pred_fallthru
      _
    %p1412 = scmp.le.s32.totalorder 2, %s11
    // Predicated region
    $region41: #{down_forward.6} parent=5 // pred_check
      %p1413 = pneg %p1412
    $region42: #{down_forward.6} parent=5 // pred_check_branch
      %1415 = sbr.rel (%p1413) target = $region44
    $region43: #{down_forward.6} parent=5 // pred_region
      %s1416 = ssub.s32 %s11, 2
      // Predicated region
      $region45: #{down_forward.6} parent=43 // pred_check
        %p1417 = pneg %p87
      $region46: #{down_forward.6} parent=43 // pred_check_branch
        %1419 = sbr.rel (%p1417) target = $region48
      $region47: #{down_forward.6} parent=43 // pred_region
        %s1420 = smul.u32 8, %s17
        %p1421 = scmp.lt.s32.totalorder %s1420, 15
        %s1422 = scalar_select %p1421, %s1420, 15
        %s1423 = smul.addr %s1422, 8
        %s1424 = scalar_lea.vmem %s2, %s1423
      $region48: #{down_forward.6} parent=43 // pred_fallthru
        _
      // Predicated region
      $region49: #{down_forward.6} parent=43 // pred_check
        %p1425 = pneg %p113
      $region50: #{down_forward.6} parent=43 // pred_check_branch
        %1427 = sbr.rel (%p1425) target = $region52
      $region51: #{down_forward.6} parent=43 // pred_region
        %p1428 = scmp.lt.s32.totalorder %s17, 1
        %s1429 = scalar_select %p1428, %s17, 1
        %s1430 = scalar_lea.vmem %s3, %s1429
      $region52: #{down_forward.6} parent=43 // pred_fallthru
        _
      // Predicated region
      $region53: #{down_forward.6} parent=43 // pred_check
        %p1431 = pneg %p139
      $region54: #{down_forward.6} parent=43 // pred_check_branch
        %1433 = sbr.rel (%p1431) target = $region56
      $region55: #{down_forward.6} parent=43 // pred_region
        %p1434 = scmp.lt.s32.totalorder %s17, 1
        %s1435 = scalar_select %p1434, %s17, 1
        %s1436 = scalar_lea.vmem %s4, %s1435
      $region56: #{down_forward.6} parent=43 // pred_fallthru
        _
    $region44: #{down_forward.6} parent=5 // pred_fallthru
      _
  $region6: #{down_forward.6} parent=0 // loop_footer
    %s15 = sadd.s32 1, %s11
  $region7: #{down_forward.6} parent=0 // loop_footer_branch
    %10 = sbr.rel target = $region3
  $region8: #{down_forward.6} parent=0 // loop_exit
    _

// kernel: down_forward.7
$region0: #{down_forward.7}
  #allocation0 [shape = 'u32[]', space=smem, size = 0x4, offset = 0x4, fixed_abs, tag = 'smem constant byte address 0x4 - core index']
  #allocation1 [shape = 'u32[144,128]{1,0:T(1,128)}', space=vmem, size = 0x12000, scoped, tag = 'internal scratch']
  %s0 = inlined_call_operand.vmem [shape: f32[128,128], index: 0, kind: input, shape index: {}]
  %s1 = inlined_call_operand.vmem [shape: f32[1,128], index: 1, kind: input, shape index: {}]
  %s2 = inlined_call_operand.vmem [shape: f32[1,128], index: 2, kind: input, shape index: {}]
  %s3 = inlined_call_operand.vmem [shape: f32[128,128], index: 3, kind: output, shape index: {}]
  %s4 = sld [smem:[#allocation0]]
  $region22: #{down_forward.7} parent=0
    _
  %s6 = ssub.s32 1, %s4
  %s7 = scalar_select 0, %s6, %s4
  // Predicated region
  $region2: #{down_forward.7} parent=0 // pred_check
    _
  $region3: #{down_forward.7} parent=0 // pred_check_branch
    %9 = sbr.rel (0) target = $region5
  $region4: #{down_forward.7} parent=0 // pred_region
    _
  $region5: #{down_forward.7} parent=0 // pred_fallthru
    _
  // Predicated region
  $region6: #{down_forward.7} parent=0 // pred_check
    _
  $region7: #{down_forward.7} parent=0 // pred_check_branch
    %11 = sbr.rel (0) target = $region9
  $region8: #{down_forward.7} parent=0 // pred_region
    _
  $region9: #{down_forward.7} parent=0 // pred_fallthru
    _
  // Predicated region
  $region10: #{down_forward.7} parent=0 // pred_check
    _
  $region11: #{down_forward.7} parent=0 // pred_check_branch
    %13 = sbr.rel (0) target = $region13
  $region12: #{down_forward.7} parent=0 // pred_region
    _
  $region13: #{down_forward.7} parent=0 // pred_fallthru
    _
  %v14 = vld [vmem:[%s0] sm:$0xff]
  %v15 = vld [vmem:[%s0 + $0x8] sm:$0xff]
  %v16 = vld [vmem:[%s0 + $0x10] sm:$0xff]
  %v17 = vld [vmem:[%s0 + $0x18] sm:$0xff]
  %v18 = vld [vmem:[%s0 + $0x20] sm:$0xff]
  %v19 = vld [vmem:[%s0 + $0x28] sm:$0xff]
  %v20 = vld [vmem:[%s0 + $0x30] sm:$0xff]
  %v21 = vld [vmem:[%s0 + $0x38] sm:$0xff]
  %v22 = vld [vmem:[%s0 + $0x40] sm:$0xff]
  %v23 = vld [vmem:[%s0 + $0x48] sm:$0xff]
  %v24 = vld [vmem:[%s0 + $0x50] sm:$0xff]
  %v25 = vld [vmem:[%s0 + $0x58] sm:$0xff]
  %v26 = vld [vmem:[%s0 + $0x60] sm:$0xff]
  %v27 = vld [vmem:[%s0 + $0x68] sm:$0xff]
  %v28 = vld [vmem:[%s0 + $0x70] sm:$0xff]
  %v29 = vld [vmem:[%s0 + $0x78] sm:$0xff]
  %v30 = vld [vmem:[%s1] sm:$0x1]
  %v32 = vlaneseq
  %v33 = vshrl.u32 %v32, 7
  %v34 = vsub.s32 0, %v33
  %v35 = vrot.slane %v30, %v34
  %v37 = vmul.f32 %v14, %v35
  %v38 = vmul.f32 %v15, %v35
  %v39 = vmul.f32 %v16, %v35
  %v40 = vmul.f32 %v17, %v35
  %v41 = vmul.f32 %v18, %v35
  %v42 = vmul.f32 %v19, %v35
  %v43 = vmul.f32 %v20, %v35
  %v44 = vmul.f32 %v21, %v35
  %v45 = vmul.f32 %v22, %v35
  %v46 = vmul.f32 %v23, %v35
  %v47 = vmul.f32 %v24, %v35
  %v48 = vmul.f32 %v25, %v35
  %v49 = vmul.f32 %v26, %v35
  %v50 = vmul.f32 %v27, %v35
  %v51 = vmul.f32 %v28, %v35
  %v52 = vmul.f32 %v29, %v35
  %v53 = vld [vmem:[%s2] sm:$0x1]
  %v55 = vlaneseq
  %v56 = vshrl.u32 %v55, 7
  %v57 = vsub.s32 0, %v56
  %v58 = vrot.slane %v53, %v57
  %v60 = vadd.f32 %v37, %v58
  %v61 = vadd.f32 %v38, %v58
  %v62 = vadd.f32 %v39, %v58
  %v63 = vadd.f32 %v40, %v58
  %v64 = vadd.f32 %v41, %v58
  %v65 = vadd.f32 %v42, %v58
  %v66 = vadd.f32 %v43, %v58
  %v67 = vadd.f32 %v44, %v58
  %v68 = vadd.f32 %v45, %v58
  %v69 = vadd.f32 %v46, %v58
  %v70 = vadd.f32 %v47, %v58
  %v71 = vadd.f32 %v48, %v58
  %v72 = vadd.f32 %v49, %v58
  %v73 = vadd.f32 %v50, %v58
  %v74 = vadd.f32 %v51, %v58
  %v75 = vadd.f32 %v52, %v58
  %v76 = vmax.f32 %v60, 0.0
  %v77 = vmax.f32 %v61, 0.0
  %v78 = vmax.f32 %v62, 0.0
  %v79 = vmax.f32 %v63, 0.0
  %v80 = vmax.f32 %v64, 0.0
  %v81 = vmax.f32 %v65, 0.0
  %v82 = vmax.f32 %v66, 0.0
  %v83 = vmax.f32 %v67, 0.0
  %v84 = vmax.f32 %v68, 0.0
  %v85 = vmax.f32 %v69, 0.0
  %v86 = vmax.f32 %v70, 0.0
  %v87 = vmax.f32 %v71, 0.0
  %v88 = vmax.f32 %v72, 0.0
  %v89 = vmax.f32 %v73, 0.0
  %v90 = vmax.f32 %v74, 0.0
  %v91 = vmax.f32 %v75, 0.0
  %92 = vst [vmem:[%s3] sm:$0xff] %v76
  %93 = vst [vmem:[%s3 + $0x8] sm:$0xff] %v77
  %94 = vst [vmem:[%s3 + $0x10] sm:$0xff] %v78
  %95 = vst [vmem:[%s3 + $0x18] sm:$0xff] %v79
  %96 = vst [vmem:[%s3 + $0x20] sm:$0xff] %v80
  %97 = vst [vmem:[%s3 + $0x28] sm:$0xff] %v81
  %98 = vst [vmem:[%s3 + $0x30] sm:$0xff] %v82
  %99 = vst [vmem:[%s3 + $0x38] sm:$0xff] %v83
  %100 = vst [vmem:[%s3 + $0x40] sm:$0xff] %v84
  %101 = vst [vmem:[%s3 + $0x48] sm:$0xff] %v85
  %102 = vst [vmem:[%s3 + $0x50] sm:$0xff] %v86
  %103 = vst [vmem:[%s3 + $0x58] sm:$0xff] %v87
  %104 = vst [vmem:[%s3 + $0x60] sm:$0xff] %v88
  %105 = vst [vmem:[%s3 + $0x68] sm:$0xff] %v89
  %106 = vst [vmem:[%s3 + $0x70] sm:$0xff] %v90
  %107 = vst [vmem:[%s3 + $0x78] sm:$0xff] %v91
  // Predicated region
  $region14: #{down_forward.7} parent=0 // pred_check
    _
  $region15: #{down_forward.7} parent=0 // pred_check_branch
    %109 = sbr.rel (0) target = $region17
  $region16: #{down_forward.7} parent=0 // pred_region
    _
  $region17: #{down_forward.7} parent=0 // pred_fallthru
    _
  // Predicated region
  $region18: #{down_forward.7} parent=0 // pred_check
    _
  $region19: #{down_forward.7} parent=0 // pred_check_branch
    %111 = sbr.rel (0) target = $region21
  $region20: #{down_forward.7} parent=0 // pred_region
    _
  $region21: #{down_forward.7} parent=0 // pred_fallthru
    _

</llo_original>
